<compile_context>
chip_gen: v7x
topology: tpu7x:2x2x1
jax: 0.10.0
libtpu: 0.0.40
codegen_flags: <defaults>
</compile_context>

<pallas_src>
import jax
import jax.numpy as jnp
from jax.experimental import pallas as pl
from jax.experimental.pallas import tpu as pltpu

_APPROX_RECIP = False  # True pushes the divide onto the EUP; off to keep 1e-5 exactness here.


# ---------------------------------------------------------------- kernel math

def _softmax_weighted(s, bias, d3):
    """Masked softmax over seq + head-mean folded into the weights.

    s: (TB,S,A) f32 scores, bias: (TB,S) f32 additive (-1e9 on pad),
    d3: (TB,S,D) data.  Returns (TB,D) f32.
    """
    s = s + bias[:, :, None]
    s_max = jnp.max(s, axis=1, keepdims=True)
    e = jnp.exp(s - s_max)
    denom = jnp.sum(e, axis=1, keepdims=True)
    attn = e * pl.reciprocal(denom, approx=_APPROX_RECIP)          # (TB,S,A)
    # mean over heads commutes with the (linear) weighted sum.
    attn_avg = jnp.mean(attn, axis=2, keepdims=True)               # (TB,S,1)
    return jnp.sum(attn_avg * d3.astype(jnp.float32), axis=1)      # (TB,D)


def _head(wt1, wt2, wp1a_ref, wp1b_ref, bp1_ref, wp2_ref, bp2_ref, out_ref):
    # cat_attn head without concat: concat([wt1,wt2]) @ wp1 == wt1@wp1[:D] + wt2@wp1[D:]
    hid = jnp.maximum(
        jnp.dot(wt1, wp1a_ref[...], preferred_element_type=jnp.float32)
        + jnp.dot(wt2, wp1b_ref[...], preferred_element_type=jnp.float32)
        + bp1_ref[...], 0.0)
    out_ref[...] = (jnp.dot(hid, wp2_ref[...], preferred_element_type=jnp.float32)
                    + bp2_ref[...])


def _fused_kernel(d1_ref, d2_ref, bias1_ref, bias2_ref,
                  w1_ref, b1_ref, w2_ref, b2_ref,
                  wp1a_ref, wp1b_ref, bp1_ref, wp2_ref, bp2_ref, out_ref):
    """Small-D path: both summaries' score MLPs fused into two wide matmuls."""
    TB, S1, D = d1_ref.shape
    _, S2, _ = d2_ref.shape
    A = w2_ref.shape[1] // 2
    d1 = d1_ref[...]
    d2 = d2_ref[...]
    # S1/S2 are padded to the sublane multiple in the wrapper -> layout-free reshapes.
    x = jnp.concatenate([d1.reshape(TB * S1, D), d2.reshape(TB * S2, D)], axis=0)
    h = jnp.maximum(
        jnp.dot(x, w1_ref[...], preferred_element_type=jnp.float32) + b1_ref[...], 0.0)
    s = jnp.dot(h, w2_ref[...], preferred_element_type=jnp.float32) + b2_ref[...]
    # w2 is block-diagonal, so the cross terms are exactly zero:
    s1 = s[:TB * S1, :A].reshape(TB, S1, A)
    s2 = s[TB * S1:, A:].reshape(TB, S2, A)
    wt1 = _softmax_weighted(s1, bias1_ref[...], d1)
    wt2 = _softmax_weighted(s2, bias2_ref[...], d2)
    _head(wt1, wt2, wp1a_ref, wp1b_ref, bp1_ref, wp2_ref, bp2_ref, out_ref)


def _separate_kernel(d1_ref, d2_ref, bias1_ref, bias2_ref,
                     w1a_ref, b1a_ref, w2a_ref, b2a_ref,
                     w1b_ref, b1b_ref, w2b_ref, b2b_ref,
                     wp1a_ref, wp1b_ref, bp1_ref, wp2_ref, bp2_ref, out_ref):
    """Large-D path: per-summary matmuls (MXU N already well filled)."""
    def summary(d_ref, bias_ref, w1, b1, w2, b2):
        TB, S, D = d_ref.shape
        d = d_ref[...]
        x = d.reshape(TB * S, D)
        h = jnp.maximum(jnp.dot(x, w1, preferred_element_type=jnp.float32) + b1, 0.0)
        s = jnp.dot(h, w2, preferred_element_type=jnp.float32) + b2
        return _softmax_weighted(s.reshape(TB, S, -1), bias_ref[...], d)

    wt1 = summary(d1_ref, bias1_ref, w1a_ref[...], b1a_ref[...], w2a_ref[...], b2a_ref[...])
    wt2 = summary(d2_ref, bias2_ref, w1b_ref[...], b1b_ref[...], w2b_ref[...], b2b_ref[...])
    _head(wt1, wt2, wp1a_ref, wp1b_ref, bp1_ref, wp2_ref, bp2_ref, out_ref)


# ---------------------------------------------------------------- wrapper

def _choose_tb(B, S1, S2, D, itemsize, target_rows=768, data_budget=36 << 20):
    """Pick the batch tile TB (and padded batch size, padding only as fallback)."""
    s_min = max(1, min(S1, S2))
    cap = max(1, -(-target_rows // s_min))                 # ~512-1024 streamed rows/step
    per_b = (S1 + S2) * D
    bytes_per_b = per_b * itemsize * 2 + per_b * 4 * 3     # double-buffered DMA + f32 temps
    cap = min(cap, max(1, data_budget // max(1, bytes_per_b)))
    if B >= 16:                                            # keep >= 2 grid steps (megacore /
        cap = min(cap, max(8, B // 2))                     #  v7x second TensorCore)
    cap = min(cap, B)
    for t in range(cap, 0, -1):                            # prefer a divisor of B -> no pad
        if B % t == 0 and (t % 8 == 0 or t == B):
            return t, B
    tb = min(((cap + 7) // 8) * 8, ((B + 7) // 8) * 8)     # rare fallback: pad the batch
    return tb, -(-B // tb) * tb


def prediction_layer(data1, data2, mask1, mask2, params, *, target_rows=768):
    B, S1, D = data1.shape
    _, S2, _ = data2.shape
    A = params["w2a"].shape[1]
    NA = params["wp2"].shape[1]
    NA_pad = ((NA + 127) // 128) * 128                     # lane-dense output store
    f32 = jnp.float32

    itemsize = data1.dtype.itemsize
    sub = max(8, 32 // max(1, itemsize))                   # sublane multiple (8 f32, 16 bf16)

    # Masks -> tiny additive f32 bias (0 valid, -1e9 pad); data streams in native dtype.
    bias1 = (mask1.astype(f32) - 1.0) * 1e9
    bias2 = (mask2.astype(f32) - 1.0) * 1e9
    d1, d2 = data1, data2

    def pad_seq(d, bias, S):
        Sp = -(-S // sub) * sub                            # keeps in-kernel reshape layout-free
        if Sp != S:
            d = jnp.pad(d, ((0, 0), (0, Sp - S), (0, 0)))
            bias = jnp.pad(bias, ((0, 0), (0, Sp - S)), constant_values=-1e9)
        return d, bias, Sp

    d1, bias1, S1p = pad_seq(d1, bias1, S1)
    d2, bias2, S2p = pad_seq(d2, bias2, S2)

    TB, B_pad = _choose_tb(B, S1p, S2p, D, itemsize, target_rows=target_rows)
    if B_pad != B:                                         # fallback only; rows sliced off below
        pad = B_pad - B
        d1 = jnp.pad(d1, ((0, pad), (0, 0), (0, 0)))
        d2 = jnp.pad(d2, ((0, pad), (0, 0), (0, 0)))
        bias1 = jnp.pad(bias1, ((0, pad), (0, 0)))
        bias2 = jnp.pad(bias2, ((0, pad), (0, 0)))

    row = lambda v: v.reshape(1, -1).astype(f32)
    wp1a = params["wp1"][:D].astype(f32)                   # split removes in-kernel concat
    wp1b = params["wp1"][D:].astype(f32)
    wp2 = jnp.pad(params["wp2"].astype(f32), ((0, 0), (0, NA_pad - NA)))
    bp2 = jnp.pad(params["bp2"].astype(f32), (0, NA_pad - NA))

    fuse = D <= 128                                        # fuse tiny-D matmuls (MXU lane fill)
    if fuse:
        w1 = jnp.concatenate([params["w1a"], params["w1b"]], axis=1).astype(f32)     # (D,2D)
        b1 = row(jnp.concatenate([params["b1a"], params["b1b"]]))                    # (1,2D)
        w2 = (jnp.zeros((2 * D, 2 * A), f32)                                         # block-diag
              .at[:D, :A].set(params["w2a"].astype(f32))
              .at[D:, A:].set(params["w2b"].astype(f32)))                            # (2D,2A)
        b2 = row(jnp.concatenate([params["b2a"], params["b2b"]]))                    # (1,2A)
        weight_args = (w1, b1, w2, b2)
        kernel = _fused_kernel
    else:
        weight_args = (params["w1a"].astype(f32), row(params["b1a"]),
                       params["w2a"].astype(f32), row(params["b2a"]),
                       params["w1b"].astype(f32), row(params["b1b"]),
                       params["w2b"].astype(f32), row(params["b2b"]))
        kernel = _separate_kernel
    weight_args = weight_args + (wp1a, wp1b, row(params["bp1"]), wp2, row(bp2))

    data_specs = [
        pl.BlockSpec((TB, S1p, D), lambda b: (b, 0, 0)),
        pl.BlockSpec((TB, S2p, D), lambda b: (b, 0, 0)),
        pl.BlockSpec((TB, S1p), lambda b: (b, 0)),
        pl.BlockSpec((TB, S2p), lambda b: (b, 0)),
    ]
    out_spec = pl.BlockSpec((TB, NA_pad), lambda b: (b, 0))

    def call(single_buffer_weights):
        def wspec(arr):
            shape = arr.shape
            imap = lambda b, _s=shape: tuple(0 for _ in _s)
            if single_buffer_weights:                      # constant index -> no double buffer
                return pl.BlockSpec(shape, imap, pipeline_mode=pl.Buffered(1))
            return pl.BlockSpec(shape, imap)

        in_specs = data_specs + [wspec(a) for a in weight_args]
        return pl.pallas_call(
            kernel,
            out_shape=jax.ShapeDtypeStruct((B_pad, NA_pad), jnp.float32),
            grid=(B_pad // TB,),
            in_specs=in_specs,
            out_specs=out_spec,
            compiler_params=pltpu.CompilerParams(
                dimension_semantics=("parallel",),
                vmem_limit_bytes=48 * 1024 * 1024),        # safe on v5e/v6e/v7x
        )(d1, d2, bias1, bias2, *weight_args)

    try:
        out = call(True)
    except Exception:                                      # pipeline_mode unsupported -> retry
        out = call(False)
    return out[:B, :NA]


# ---------------------------------------------------------------- reference / init

def reference(data1, data2, mask1, mask2, p):
    """Pure-JAX reference mirroring the PyTorch forward (eval mode)."""
    def summary(d, m, w1, b1, w2, b2):
        h = jnp.maximum(d @ w1 + b1, 0.0)
        s = h @ w2 + b2
        s = jnp.where(m[..., None] > 0, s, -1e9)
        attn = jax.nn.softmax(s, axis=1)
        w = jnp.einsum('bsa,bsd->bad', attn, d)
        return w.mean(axis=1)
    wt1 = summary(data1, mask1, p["w1a"], p["b1a"], p["w2a"], p["b2a"])
    wt2 = summary(data2, mask2, p["w1b"], p["b1b"], p["w2b"], p["b2b"])
    feat = jnp.concatenate([wt1, wt2], axis=1)
    hid = jnp.maximum(feat @ p["wp1"] + p["bp1"], 0.0)
    return hid @ p["wp2"] + p["bp2"]


def init_params(key, dim, num_attn, num_ans):
    """Deterministic PyTorch-Linear-style init: U(-1/sqrt(fan_in), 1/sqrt(fan_in))."""
    def linear(k, fan_in, fan_out):
        kw, kb = jax.random.split(k)
        bound = 1.0 / jnp.sqrt(fan_in)
        w = jax.random.uniform(kw, (fan_in, fan_out), jnp.float32, -bound, bound)
        b = jax.random.uniform(kb, (fan_out,), jnp.float32, -bound, bound)
        return w, b

    ks = jax.random.split(key, 6)
    w1a, b1a = linear(ks[0], dim, dim)
    w2a, b2a = linear(ks[1], dim, num_attn)
    w1b, b1b = linear(ks[2], dim, dim)
    w2b, b2b = linear(ks[3], dim, num_attn)
    wp1, bp1 = linear(ks[4], 2 * dim, dim)                 # cat_attn -> in = 2 * hidden_size
    wp2, bp2 = linear(ks[5], dim, num_ans)
    return dict(w1a=w1a, b1a=b1a, w2a=w2a, b2a=b2a,
                w1b=w1b, b1b=b1b, w2b=w2b, b2b=b2b,
                wp1=wp1, bp1=bp1, wp2=wp2, bp2=bp2)


if __name__ == "__main__":
    B, S1, S2, D = 2, 16, 8, 32
    NUM_ATTN, NUM_ANS = 2, 10

    key = jax.random.PRNGKey(0)
    k1, k2, kp = jax.random.split(key, 3)
    data1 = jax.random.normal(k1, (B, S1, D), jnp.float32)
    data2 = jax.random.normal(k2, (B, S2, D), jnp.float32)

    # masks: 1.0 = valid token, 0.0 = padding (batch 1 has some padded tail)
    mask1 = jnp.ones((B, S1), jnp.float32).at[1, S1 - 4:].set(0.0)
    mask2 = jnp.ones((B, S2), jnp.float32).at[1, S2 - 2:].set(0.0)

    params = init_params(kp, D, NUM_ATTN, NUM_ANS)

    out = jax.block_until_ready(prediction_layer(data1, data2, mask1, mask2, params))
    ref = reference(data1, data2, mask1, mask2, params)

    assert out.shape == (B, NUM_ANS)
    assert jnp.allclose(out, ref, rtol=1e-5, atol=1e-5), (out, ref)
    print("KERNEL_OK")
</pallas_src>

<mosaic_0001>
module attributes {stable_mosaic.version = 11 : i64} {
  func.func @_fused_kernel(%arg0: i32, %arg1: memref<2x16x32xf32, #tpu.memory_space<vmem>>, %arg2: memref<2x8x32xf32, #tpu.memory_space<vmem>>, %arg3: memref<2x16xf32, #tpu.memory_space<vmem>>, %arg4: memref<2x8xf32, #tpu.memory_space<vmem>>, %arg5: memref<32x64xf32, #tpu.memory_space<vmem>>, %arg6: memref<1x64xf32, #tpu.memory_space<vmem>>, %arg7: memref<64x4xf32, #tpu.memory_space<vmem>>, %arg8: memref<1x4xf32, #tpu.memory_space<vmem>>, %arg9: memref<32x32xf32, #tpu.memory_space<vmem>>, %arg10: memref<32x32xf32, #tpu.memory_space<vmem>>, %arg11: memref<1x32xf32, #tpu.memory_space<vmem>>, %arg12: memref<32x128xf32, #tpu.memory_space<vmem>>, %arg13: memref<1x128xf32, #tpu.memory_space<vmem>>, %arg14: memref<2x128xf32, #tpu.memory_space<vmem>>) attributes {dimension_semantics = [#tpu.dimension_semantics<parallel>], iteration_bounds = array<i64: 1>, scalar_prefetch = 0 : i64, scratch_operands = 0 : i64, tpu.core_type = #tpu.core_type<tc>, window_params = [{transform_indices = @transform_0, window_bounds = array<i64: 2, 16, 32>}, {transform_indices = @transform_1, window_bounds = array<i64: 2, 8, 32>}, {transform_indices = @transform_2, window_bounds = array<i64: 2, 16>}, {transform_indices = @transform_3, window_bounds = array<i64: 2, 8>}, {pipeline_mode = #tpu.pipeline_mode<synchronous>, transform_indices = @transform_4, window_bounds = array<i64: 32, 64>}, {pipeline_mode = #tpu.pipeline_mode<synchronous>, transform_indices = @transform_5, window_bounds = array<i64: 1, 64>}, {pipeline_mode = #tpu.pipeline_mode<synchronous>, transform_indices = @transform_6, window_bounds = array<i64: 64, 4>}, {pipeline_mode = #tpu.pipeline_mode<synchronous>, transform_indices = @transform_7, window_bounds = array<i64: 1, 4>}, {pipeline_mode = #tpu.pipeline_mode<synchronous>, transform_indices = @transform_8, window_bounds = array<i64: 32, 32>}, {pipeline_mode = #tpu.pipeline_mode<synchronous>, transform_indices = @transform_9, window_bounds = array<i64: 32, 32>}, {pipeline_mode = #tpu.pipeline_mode<synchronous>, transform_indices = @transform_10, window_bounds = array<i64: 1, 32>}, {pipeline_mode = #tpu.pipeline_mode<synchronous>, transform_indices = @transform_11, window_bounds = array<i64: 32, 128>}, {pipeline_mode = #tpu.pipeline_mode<synchronous>, transform_indices = @transform_12, window_bounds = array<i64: 1, 128>}, {transform_indices = @transform_13, window_bounds = array<i64: 2, 128>}]} {
    %c0 = arith.constant 0 : index
    %c0_0 = arith.constant 0 : index
    %c0_1 = arith.constant 0 : index
    %0 = vector.load %arg1[%c0, %c0_0, %c0_1] : memref<2x16x32xf32, #tpu.memory_space<vmem>>, vector<2x16x32xf32>
    %c0_2 = arith.constant 0 : index
    %c0_3 = arith.constant 0 : index
    %c0_4 = arith.constant 0 : index
    %1 = vector.load %arg2[%c0_2, %c0_3, %c0_4] : memref<2x8x32xf32, #tpu.memory_space<vmem>>, vector<2x8x32xf32>
    %2 = vector.shape_cast %0 : vector<2x16x32xf32> to vector<32x32xf32>
    %3 = vector.shape_cast %1 : vector<2x8x32xf32> to vector<16x32xf32>
    %4 = tpu.concatenate %2, %3 in 0 : vector<32x32xf32>, vector<16x32xf32> -> vector<48x32xf32>
    %c0_5 = arith.constant 0 : index
    %c0_6 = arith.constant 0 : index
    %5 = vector.load %arg5[%c0_5, %c0_6] : memref<32x64xf32, #tpu.memory_space<vmem>>, vector<32x64xf32>
    %cst = arith.constant dense<0.000000e+00> : vector<48x64xf32>
    %6 = tpu.matmul %4, %5, %cst {dimension_numbers = #tpu.dot_dimension_numbers<[1], [0], [0], [1], [0, 0, 1, 1], [], []>} : vector<48x32xf32>, vector<32x64xf32>, vector<48x64xf32> -> vector<48x64xf32>
    %c0_7 = arith.constant 0 : index
    %c0_8 = arith.constant 0 : index
    %7 = vector.load %arg6[%c0_7, %c0_8] : memref<1x64xf32, #tpu.memory_space<vmem>>, vector<1x64xf32>
    %8 = vector.broadcast %7 : vector<1x64xf32> to vector<48x64xf32>
    %9 = arith.addf %6, %8 : vector<48x64xf32>
    %cst_9 = arith.constant 0.000000e+00 : f32
    %10 = vector.broadcast %cst_9 : f32 to vector<48x64xf32>
    %11 = arith.maximumf %9, %10 : vector<48x64xf32>
    %c0_10 = arith.constant 0 : index
    %c0_11 = arith.constant 0 : index
    %12 = vector.load %arg7[%c0_10, %c0_11] : memref<64x4xf32, #tpu.memory_space<vmem>>, vector<64x4xf32>
    %cst_12 = arith.constant dense<0.000000e+00> : vector<48x4xf32>
    %13 = tpu.matmul %11, %12, %cst_12 {dimension_numbers = #tpu.dot_dimension_numbers<[1], [0], [0], [1], [0, 0, 1, 1], [], []>} : vector<48x64xf32>, vector<64x4xf32>, vector<48x4xf32> -> vector<48x4xf32>
    %c0_13 = arith.constant 0 : index
    %c0_14 = arith.constant 0 : index
    %14 = vector.load %arg8[%c0_13, %c0_14] : memref<1x4xf32, #tpu.memory_space<vmem>>, vector<1x4xf32>
    %15 = vector.broadcast %14 : vector<1x4xf32> to vector<48x4xf32>
    %16 = arith.addf %13, %15 : vector<48x4xf32>
    %17 = vector.extract_strided_slice %16 {offsets = [0, 0], sizes = [32, 2], strides = [1, 1]} : vector<48x4xf32> to vector<32x2xf32>
    %18 = vector.shape_cast %17 : vector<32x2xf32> to vector<2x16x2xf32>
    %19 = vector.extract_strided_slice %16 {offsets = [32, 2], sizes = [16, 2], strides = [1, 1]} : vector<48x4xf32> to vector<16x2xf32>
    %20 = vector.shape_cast %19 : vector<16x2xf32> to vector<2x8x2xf32>
    %c0_15 = arith.constant 0 : index
    %c0_16 = arith.constant 0 : index
    %21 = vector.load %arg3[%c0_15, %c0_16] : memref<2x16xf32, #tpu.memory_space<vmem>>, vector<2x16xf32>
    %22 = vector.shape_cast %21 : vector<2x16xf32> to vector<2x16x1xf32>
    %23 = vector.broadcast %22 : vector<2x16x1xf32> to vector<2x16x2xf32>
    %24 = arith.addf %18, %23 : vector<2x16x2xf32>
    %cst_17 = arith.constant dense<0xFF800000> : vector<2x2xf32>
    %25 = vector.multi_reduction <maximumf>, %24, %cst_17 [1] : vector<2x16x2xf32> to vector<2x2xf32>
    %26 = vector.shape_cast %25 : vector<2x2xf32> to vector<2x1x2xf32>
    %27 = vector.broadcast %26 : vector<2x1x2xf32> to vector<2x16x2xf32>
    %28 = arith.subf %24, %27 : vector<2x16x2xf32>
    %29 = math.exp %28 : vector<2x16x2xf32>
    %cst_18 = arith.constant dense<0.000000e+00> : vector<2x2xf32>
    %30 = vector.multi_reduction <add>, %29, %cst_18 [1] : vector<2x16x2xf32> to vector<2x2xf32>
    %31 = vector.shape_cast %30 : vector<2x2xf32> to vector<2x1x2xf32>
    %32 = tpu.reciprocal %31 : vector<2x1x2xf32> -> vector<2x1x2xf32>
    %33 = vector.broadcast %32 : vector<2x1x2xf32> to vector<2x16x2xf32>
    %34 = arith.mulf %29, %33 : vector<2x16x2xf32>
    %cst_19 = arith.constant dense<0.000000e+00> : vector<2x16xf32>
    %35 = vector.multi_reduction <add>, %34, %cst_19 [2] : vector<2x16x2xf32> to vector<2x16xf32>
    %36 = vector.shape_cast %35 : vector<2x16xf32> to vector<2x16x1xf32>
    %cst_20 = arith.constant 2.000000e+00 : f32
    %37 = vector.broadcast %cst_20 : f32 to vector<2x16x1xf32>
    %38 = arith.divf %36, %37 : vector<2x16x1xf32>
    %39 = vector.broadcast %38 : vector<2x16x1xf32> to vector<2x16x32xf32>
    %40 = arith.mulf %39, %0 : vector<2x16x32xf32>
    %cst_21 = arith.constant dense<0.000000e+00> : vector<2x32xf32>
    %41 = vector.multi_reduction <add>, %40, %cst_21 [1] : vector<2x16x32xf32> to vector<2x32xf32>
    %c0_22 = arith.constant 0 : index
    %c0_23 = arith.constant 0 : index
    %42 = vector.load %arg4[%c0_22, %c0_23] : memref<2x8xf32, #tpu.memory_space<vmem>>, vector<2x8xf32>
    %43 = vector.shape_cast %42 : vector<2x8xf32> to vector<2x8x1xf32>
    %44 = vector.broadcast %43 : vector<2x8x1xf32> to vector<2x8x2xf32>
    %45 = arith.addf %20, %44 : vector<2x8x2xf32>
    %cst_24 = arith.constant dense<0xFF800000> : vector<2x2xf32>
    %46 = vector.multi_reduction <maximumf>, %45, %cst_24 [1] : vector<2x8x2xf32> to vector<2x2xf32>
    %47 = vector.shape_cast %46 : vector<2x2xf32> to vector<2x1x2xf32>
    %48 = vector.broadcast %47 : vector<2x1x2xf32> to vector<2x8x2xf32>
    %49 = arith.subf %45, %48 : vector<2x8x2xf32>
    %50 = math.exp %49 : vector<2x8x2xf32>
    %cst_25 = arith.constant dense<0.000000e+00> : vector<2x2xf32>
    %51 = vector.multi_reduction <add>, %50, %cst_25 [1] : vector<2x8x2xf32> to vector<2x2xf32>
    %52 = vector.shape_cast %51 : vector<2x2xf32> to vector<2x1x2xf32>
    %53 = tpu.reciprocal %52 : vector<2x1x2xf32> -> vector<2x1x2xf32>
    %54 = vector.broadcast %53 : vector<2x1x2xf32> to vector<2x8x2xf32>
    %55 = arith.mulf %50, %54 : vector<2x8x2xf32>
    %cst_26 = arith.constant dense<0.000000e+00> : vector<2x8xf32>
    %56 = vector.multi_reduction <add>, %55, %cst_26 [2] : vector<2x8x2xf32> to vector<2x8xf32>
    %57 = vector.shape_cast %56 : vector<2x8xf32> to vector<2x8x1xf32>
    %cst_27 = arith.constant 2.000000e+00 : f32
    %58 = vector.broadcast %cst_27 : f32 to vector<2x8x1xf32>
    %59 = arith.divf %57, %58 : vector<2x8x1xf32>
    %60 = vector.broadcast %59 : vector<2x8x1xf32> to vector<2x8x32xf32>
    %61 = arith.mulf %60, %1 : vector<2x8x32xf32>
    %cst_28 = arith.constant dense<0.000000e+00> : vector<2x32xf32>
    %62 = vector.multi_reduction <add>, %61, %cst_28 [1] : vector<2x8x32xf32> to vector<2x32xf32>
    %c0_29 = arith.constant 0 : index
    %c0_30 = arith.constant 0 : index
    %63 = vector.load %arg9[%c0_29, %c0_30] : memref<32x32xf32, #tpu.memory_space<vmem>>, vector<32x32xf32>
    %cst_31 = arith.constant dense<0.000000e+00> : vector<2x32xf32>
    %64 = tpu.matmul %41, %63, %cst_31 {dimension_numbers = #tpu.dot_dimension_numbers<[1], [0], [0], [1], [0, 0, 1, 1], [], []>} : vector<2x32xf32>, vector<32x32xf32>, vector<2x32xf32> -> vector<2x32xf32>
    %c0_32 = arith.constant 0 : index
    %c0_33 = arith.constant 0 : index
    %65 = vector.load %arg10[%c0_32, %c0_33] : memref<32x32xf32, #tpu.memory_space<vmem>>, vector<32x32xf32>
    %cst_34 = arith.constant dense<0.000000e+00> : vector<2x32xf32>
    %66 = tpu.matmul %62, %65, %cst_34 {dimension_numbers = #tpu.dot_dimension_numbers<[1], [0], [0], [1], [0, 0, 1, 1], [], []>} : vector<2x32xf32>, vector<32x32xf32>, vector<2x32xf32> -> vector<2x32xf32>
    %67 = arith.addf %64, %66 : vector<2x32xf32>
    %c0_35 = arith.constant 0 : index
    %c0_36 = arith.constant 0 : index
    %68 = vector.load %arg11[%c0_35, %c0_36] : memref<1x32xf32, #tpu.memory_space<vmem>>, vector<1x32xf32>
    %69 = vector.broadcast %68 : vector<1x32xf32> to vector<2x32xf32>
    %70 = arith.addf %67, %69 : vector<2x32xf32>
    %cst_37 = arith.constant 0.000000e+00 : f32
    %71 = vector.broadcast %cst_37 : f32 to vector<2x32xf32>
    %72 = arith.maximumf %70, %71 : vector<2x32xf32>
    %c0_38 = arith.constant 0 : index
    %c0_39 = arith.constant 0 : index
    %73 = vector.load %arg12[%c0_38, %c0_39] : memref<32x128xf32, #tpu.memory_space<vmem>>, vector<32x128xf32>
    %cst_40 = arith.constant dense<0.000000e+00> : vector<2x128xf32>
    %74 = tpu.matmul %72, %73, %cst_40 {dimension_numbers = #tpu.dot_dimension_numbers<[1], [0], [0], [1], [0, 0, 1, 1], [], []>} : vector<2x32xf32>, vector<32x128xf32>, vector<2x128xf32> -> vector<2x128xf32>
    %c0_41 = arith.constant 0 : index
    %c0_42 = arith.constant 0 : index
    %75 = vector.load %arg13[%c0_41, %c0_42] : memref<1x128xf32, #tpu.memory_space<vmem>>, vector<1x128xf32>
    %76 = vector.broadcast %75 : vector<1x128xf32> to vector<2x128xf32>
    %77 = arith.addf %74, %76 : vector<2x128xf32>
    %c0_43 = arith.constant 0 : index
    %c0_44 = arith.constant 0 : index
    %78 = vector.load %arg14[%c0_43, %c0_44] : memref<2x128xf32, #tpu.memory_space<vmem>>, vector<2x128xf32>
    tpu.vector_store %arg14[%c0_43, %c0_44], %77 {strides = array<i32>} : memref<2x128xf32, #tpu.memory_space<vmem>>, vector<2x128xf32>,
    return
  }
  func.func @transform_0(%arg0: i32) -> (i32, i32, i32) {
    %c0_i32 = arith.constant 0 : i32
    %c0_i32_0 = arith.constant 0 : i32
    %c0_i32_1 = arith.constant 0 : i32
    return %arg0, %c0_i32, %c0_i32_0 : i32, i32, i32
  }
  func.func @transform_1(%arg0: i32) -> (i32, i32, i32) {
    %c0_i32 = arith.constant 0 : i32
    %c0_i32_0 = arith.constant 0 : i32
    %c0_i32_1 = arith.constant 0 : i32
    return %arg0, %c0_i32, %c0_i32_0 : i32, i32, i32
  }
  func.func @transform_2(%arg0: i32) -> (i32, i32) {
    %c0_i32 = arith.constant 0 : i32
    %c0_i32_0 = arith.constant 0 : i32
    return %arg0, %c0_i32 : i32, i32
  }
  func.func @transform_3(%arg0: i32) -> (i32, i32) {
    %c0_i32 = arith.constant 0 : i32
    %c0_i32_0 = arith.constant 0 : i32
    return %arg0, %c0_i32 : i32, i32
  }
  func.func @transform_4(%arg0: i32) -> (i32, i32) {
    %c0_i32 = arith.constant 0 : i32
    %c0_i32_0 = arith.constant 0 : i32
    %c0_i32_1 = arith.constant 0 : i32
    return %c0_i32, %c0_i32_0 : i32, i32
  }
  func.func @transform_5(%arg0: i32) -> (i32, i32) {
    %c0_i32 = arith.constant 0 : i32
    %c0_i32_0 = arith.constant 0 : i32
    %c0_i32_1 = arith.constant 0 : i32
    return %c0_i32, %c0_i32_0 : i32, i32
  }
  func.func @transform_6(%arg0: i32) -> (i32, i32) {
    %c0_i32 = arith.constant 0 : i32
    %c0_i32_0 = arith.constant 0 : i32
    %c0_i32_1 = arith.constant 0 : i32
    return %c0_i32, %c0_i32_0 : i32, i32
  }
  func.func @transform_7(%arg0: i32) -> (i32, i32) {
    %c0_i32 = arith.constant 0 : i32
    %c0_i32_0 = arith.constant 0 : i32
    %c0_i32_1 = arith.constant 0 : i32
    return %c0_i32, %c0_i32_0 : i32, i32
  }
  func.func @transform_8(%arg0: i32) -> (i32, i32) {
    %c0_i32 = arith.constant 0 : i32
    %c0_i32_0 = arith.constant 0 : i32
    %c0_i32_1 = arith.constant 0 : i32
    return %c0_i32, %c0_i32_0 : i32, i32
  }
  func.func @transform_9(%arg0: i32) -> (i32, i32) {
    %c0_i32 = arith.constant 0 : i32
    %c0_i32_0 = arith.constant 0 : i32
    %c0_i32_1 = arith.constant 0 : i32
    return %c0_i32, %c0_i32_0 : i32, i32
  }
  func.func @transform_10(%arg0: i32) -> (i32, i32) {
    %c0_i32 = arith.constant 0 : i32
    %c0_i32_0 = arith.constant 0 : i32
    %c0_i32_1 = arith.constant 0 : i32
    return %c0_i32, %c0_i32_0 : i32, i32
  }
  func.func @transform_11(%arg0: i32) -> (i32, i32) {
    %c0_i32 = arith.constant 0 : i32
    %c0_i32_0 = arith.constant 0 : i32
    %c0_i32_1 = arith.constant 0 : i32
    return %c0_i32, %c0_i32_0 : i32, i32
  }
  func.func @transform_12(%arg0: i32) -> (i32, i32) {
    %c0_i32 = arith.constant 0 : i32
    %c0_i32_0 = arith.constant 0 : i32
    %c0_i32_1 = arith.constant 0 : i32
    return %c0_i32, %c0_i32_0 : i32, i32
  }
  func.func @transform_13(%arg0: i32) -> (i32, i32) {
    %c0_i32 = arith.constant 0 : i32
    %c0_i32_0 = arith.constant 0 : i32
    return %arg0, %c0_i32 : i32, i32
  }
}

module attributes {stable_mosaic.version = 11 : i64} {
  func.func @_fused_kernel(%arg0: i32, %arg1: memref<2x16x32xf32, #tpu.memory_space<vmem>>, %arg2: memref<2x8x32xf32, #tpu.memory_space<vmem>>, %arg3: memref<2x16xf32, #tpu.memory_space<vmem>>, %arg4: memref<2x8xf32, #tpu.memory_space<vmem>>, %arg5: memref<32x64xf32, #tpu.memory_space<vmem>>, %arg6: memref<1x64xf32, #tpu.memory_space<vmem>>, %arg7: memref<64x4xf32, #tpu.memory_space<vmem>>, %arg8: memref<1x4xf32, #tpu.memory_space<vmem>>, %arg9: memref<32x32xf32, #tpu.memory_space<vmem>>, %arg10: memref<32x32xf32, #tpu.memory_space<vmem>>, %arg11: memref<1x32xf32, #tpu.memory_space<vmem>>, %arg12: memref<32x128xf32, #tpu.memory_space<vmem>>, %arg13: memref<1x128xf32, #tpu.memory_space<vmem>>, %arg14: memref<2x128xf32, #tpu.memory_space<vmem>>) attributes {dimension_semantics = [#tpu.dimension_semantics<parallel>], iteration_bounds = array<i64: 1>, scalar_prefetch = 0 : i64, scratch_operands = 0 : i64, tpu.core_type = #tpu.core_type<tc>, window_params = [{transform_indices = @transform_0, window_bounds = array<i64: 2, 16, 32>}, {transform_indices = @transform_1, window_bounds = array<i64: 2, 8, 32>}, {transform_indices = @transform_2, window_bounds = array<i64: 2, 16>}, {transform_indices = @transform_3, window_bounds = array<i64: 2, 8>}, {pipeline_mode = #tpu.pipeline_mode<synchronous>, transform_indices = @transform_4, window_bounds = array<i64: 32, 64>}, {pipeline_mode = #tpu.pipeline_mode<synchronous>, transform_indices = @transform_5, window_bounds = array<i64: 1, 64>}, {pipeline_mode = #tpu.pipeline_mode<synchronous>, transform_indices = @transform_6, window_bounds = array<i64: 64, 4>}, {pipeline_mode = #tpu.pipeline_mode<synchronous>, transform_indices = @transform_7, window_bounds = array<i64: 1, 4>}, {pipeline_mode = #tpu.pipeline_mode<synchronous>, transform_indices = @transform_8, window_bounds = array<i64: 32, 32>}, {pipeline_mode = #tpu.pipeline_mode<synchronous>, transform_indices = @transform_9, window_bounds = array<i64: 32, 32>}, {pipeline_mode = #tpu.pipeline_mode<synchronous>, transform_indices = @transform_10, window_bounds = array<i64: 1, 32>}, {pipeline_mode = #tpu.pipeline_mode<synchronous>, transform_indices = @transform_11, window_bounds = array<i64: 32, 128>}, {pipeline_mode = #tpu.pipeline_mode<synchronous>, transform_indices = @transform_12, window_bounds = array<i64: 1, 128>}, {transform_indices = @transform_13, window_bounds = array<i64: 2, 128>}]} {
    %c0 = arith.constant 0 : index
    %c0_0 = arith.constant 0 : index
    %c0_1 = arith.constant 0 : index
    %0 = vector.load %arg1[%c0, %c0_0, %c0_1] : memref<2x16x32xf32, #tpu.memory_space<vmem>>, vector<2x16x32xf32>
    %c0_2 = arith.constant 0 : index
    %c0_3 = arith.constant 0 : index
    %c0_4 = arith.constant 0 : index
    %1 = vector.load %arg2[%c0_2, %c0_3, %c0_4] : memref<2x8x32xf32, #tpu.memory_space<vmem>>, vector<2x8x32xf32>
    %2 = vector.shape_cast %0 : vector<2x16x32xf32> to vector<32x32xf32>
    %3 = vector.shape_cast %1 : vector<2x8x32xf32> to vector<16x32xf32>
    %4 = tpu.concatenate %2, %3 in 0 : vector<32x32xf32>, vector<16x32xf32> -> vector<48x32xf32>
    %c0_5 = arith.constant 0 : index
    %c0_6 = arith.constant 0 : index
    %5 = vector.load %arg5[%c0_5, %c0_6] : memref<32x64xf32, #tpu.memory_space<vmem>>, vector<32x64xf32>
    %cst = arith.constant dense<0.000000e+00> : vector<48x64xf32>
    %6 = tpu.matmul %4, %5, %cst {dimension_numbers = #tpu.dot_dimension_numbers<[1], [0], [0], [1], [0, 0, 1, 1], [], []>} : vector<48x32xf32>, vector<32x64xf32>, vector<48x64xf32> -> vector<48x64xf32>
    %c0_7 = arith.constant 0 : index
    %c0_8 = arith.constant 0 : index
    %7 = vector.load %arg6[%c0_7, %c0_8] : memref<1x64xf32, #tpu.memory_space<vmem>>, vector<1x64xf32>
    %8 = vector.broadcast %7 : vector<1x64xf32> to vector<48x64xf32>
    %9 = arith.addf %6, %8 : vector<48x64xf32>
    %cst_9 = arith.constant 0.000000e+00 : f32
    %10 = vector.broadcast %cst_9 : f32 to vector<48x64xf32>
    %11 = arith.maximumf %9, %10 : vector<48x64xf32>
    %c0_10 = arith.constant 0 : index
    %c0_11 = arith.constant 0 : index
    %12 = vector.load %arg7[%c0_10, %c0_11] : memref<64x4xf32, #tpu.memory_space<vmem>>, vector<64x4xf32>
    %cst_12 = arith.constant dense<0.000000e+00> : vector<48x4xf32>
    %13 = tpu.matmul %11, %12, %cst_12 {dimension_numbers = #tpu.dot_dimension_numbers<[1], [0], [0], [1], [0, 0, 1, 1], [], []>} : vector<48x64xf32>, vector<64x4xf32>, vector<48x4xf32> -> vector<48x4xf32>
    %c0_13 = arith.constant 0 : index
    %c0_14 = arith.constant 0 : index
    %14 = vector.load %arg8[%c0_13, %c0_14] : memref<1x4xf32, #tpu.memory_space<vmem>>, vector<1x4xf32>
    %15 = vector.broadcast %14 : vector<1x4xf32> to vector<48x4xf32>
    %16 = arith.addf %13, %15 : vector<48x4xf32>
    %17 = vector.extract_strided_slice %16 {offsets = [0, 0], sizes = [32, 2], strides = [1, 1]} : vector<48x4xf32> to vector<32x2xf32>
    %18 = vector.shape_cast %17 : vector<32x2xf32> to vector<2x16x2xf32>
    %19 = vector.extract_strided_slice %16 {offsets = [32, 2], sizes = [16, 2], strides = [1, 1]} : vector<48x4xf32> to vector<16x2xf32>
    %20 = vector.shape_cast %19 : vector<16x2xf32> to vector<2x8x2xf32>
    %c0_15 = arith.constant 0 : index
    %c0_16 = arith.constant 0 : index
    %21 = vector.load %arg3[%c0_15, %c0_16] : memref<2x16xf32, #tpu.memory_space<vmem>>, vector<2x16xf32>
    %22 = vector.shape_cast %21 : vector<2x16xf32> to vector<2x16x1xf32>
    %23 = vector.broadcast %22 : vector<2x16x1xf32> to vector<2x16x2xf32>
    %24 = arith.addf %18, %23 : vector<2x16x2xf32>
    %cst_17 = arith.constant dense<0xFF800000> : vector<2x2xf32>
    %25 = vector.multi_reduction <maximumf>, %24, %cst_17 [1] : vector<2x16x2xf32> to vector<2x2xf32>
    %26 = vector.shape_cast %25 : vector<2x2xf32> to vector<2x1x2xf32>
    %27 = vector.broadcast %26 : vector<2x1x2xf32> to vector<2x16x2xf32>
    %28 = arith.subf %24, %27 : vector<2x16x2xf32>
    %29 = math.exp %28 : vector<2x16x2xf32>
    %cst_18 = arith.constant dense<0.000000e+00> : vector<2x2xf32>
    %30 = vector.multi_reduction <add>, %29, %cst_18 [1] : vector<2x16x2xf32> to vector<2x2xf32>
    %31 = vector.shape_cast %30 : vector<2x2xf32> to vector<2x1x2xf32>
    %32 = tpu.reciprocal %31 : vector<2x1x2xf32> -> vector<2x1x2xf32>
    %33 = vector.broadcast %32 : vector<2x1x2xf32> to vector<2x16x2xf32>
    %34 = arith.mulf %29, %33 : vector<2x16x2xf32>
    %cst_19 = arith.constant dense<0.000000e+00> : vector<2x16xf32>
    %35 = vector.multi_reduction <add>, %34, %cst_19 [2] : vector<2x16x2xf32> to vector<2x16xf32>
    %36 = vector.shape_cast %35 : vector<2x16xf32> to vector<2x16x1xf32>
    %cst_20 = arith.constant 2.000000e+00 : f32
    %37 = vector.broadcast %cst_20 : f32 to vector<2x16x1xf32>
    %38 = arith.divf %36, %37 : vector<2x16x1xf32>
    %39 = vector.broadcast %38 : vector<2x16x1xf32> to vector<2x16x32xf32>
    %40 = arith.mulf %39, %0 : vector<2x16x32xf32>
    %cst_21 = arith.constant dense<0.000000e+00> : vector<2x32xf32>
    %41 = vector.multi_reduction <add>, %40, %cst_21 [1] : vector<2x16x32xf32> to vector<2x32xf32>
    %c0_22 = arith.constant 0 : index
    %c0_23 = arith.constant 0 : index
    %42 = vector.load %arg4[%c0_22, %c0_23] : memref<2x8xf32, #tpu.memory_space<vmem>>, vector<2x8xf32>
    %43 = vector.shape_cast %42 : vector<2x8xf32> to vector<2x8x1xf32>
    %44 = vector.broadcast %43 : vector<2x8x1xf32> to vector<2x8x2xf32>
    %45 = arith.addf %20, %44 : vector<2x8x2xf32>
    %cst_24 = arith.constant dense<0xFF800000> : vector<2x2xf32>
    %46 = vector.multi_reduction <maximumf>, %45, %cst_24 [1] : vector<2x8x2xf32> to vector<2x2xf32>
    %47 = vector.shape_cast %46 : vector<2x2xf32> to vector<2x1x2xf32>
    %48 = vector.broadcast %47 : vector<2x1x2xf32> to vector<2x8x2xf32>
    %49 = arith.subf %45, %48 : vector<2x8x2xf32>
    %50 = math.exp %49 : vector<2x8x2xf32>
    %cst_25 = arith.constant dense<0.000000e+00> : vector<2x2xf32>
    %51 = vector.multi_reduction <add>, %50, %cst_25 [1] : vector<2x8x2xf32> to vector<2x2xf32>
    %52 = vector.shape_cast %51 : vector<2x2xf32> to vector<2x1x2xf32>
    %53 = tpu.reciprocal %52 : vector<2x1x2xf32> -> vector<2x1x2xf32>
    %54 = vector.broadcast %53 : vector<2x1x2xf32> to vector<2x8x2xf32>
    %55 = arith.mulf %50, %54 : vector<2x8x2xf32>
    %cst_26 = arith.constant dense<0.000000e+00> : vector<2x8xf32>
    %56 = vector.multi_reduction <add>, %55, %cst_26 [2] : vector<2x8x2xf32> to vector<2x8xf32>
    %57 = vector.shape_cast %56 : vector<2x8xf32> to vector<2x8x1xf32>
    %cst_27 = arith.constant 2.000000e+00 : f32
    %58 = vector.broadcast %cst_27 : f32 to vector<2x8x1xf32>
    %59 = arith.divf %57, %58 : vector<2x8x1xf32>
    %60 = vector.broadcast %59 : vector<2x8x1xf32> to vector<2x8x32xf32>
    %61 = arith.mulf %60, %1 : vector<2x8x32xf32>
    %cst_28 = arith.constant dense<0.000000e+00> : vector<2x32xf32>
    %62 = vector.multi_reduction <add>, %61, %cst_28 [1] : vector<2x8x32xf32> to vector<2x32xf32>
    %c0_29 = arith.constant 0 : index
    %c0_30 = arith.constant 0 : index
    %63 = vector.load %arg9[%c0_29, %c0_30] : memref<32x32xf32, #tpu.memory_space<vmem>>, vector<32x32xf32>
    %cst_31 = arith.constant dense<0.000000e+00> : vector<2x32xf32>
    %64 = tpu.matmul %41, %63, %cst_31 {dimension_numbers = #tpu.dot_dimension_numbers<[1], [0], [0], [1], [0, 0, 1, 1], [], []>} : vector<2x32xf32>, vector<32x32xf32>, vector<2x32xf32> -> vector<2x32xf32>
    %c0_32 = arith.constant 0 : index
    %c0_33 = arith.constant 0 : index
    %65 = vector.load %arg10[%c0_32, %c0_33] : memref<32x32xf32, #tpu.memory_space<vmem>>, vector<32x32xf32>
    %cst_34 = arith.constant dense<0.000000e+00> : vector<2x32xf32>
    %66 = tpu.matmul %62, %65, %cst_34 {dimension_numbers = #tpu.dot_dimension_numbers<[1], [0], [0], [1], [0, 0, 1, 1], [], []>} : vector<2x32xf32>, vector<32x32xf32>, vector<2x32xf32> -> vector<2x32xf32>
    %67 = arith.addf %64, %66 : vector<2x32xf32>
    %c0_35 = arith.constant 0 : index
    %c0_36 = arith.constant 0 : index
    %68 = vector.load %arg11[%c0_35, %c0_36] : memref<1x32xf32, #tpu.memory_space<vmem>>, vector<1x32xf32>
    %69 = vector.broadcast %68 : vector<1x32xf32> to vector<2x32xf32>
    %70 = arith.addf %67, %69 : vector<2x32xf32>
    %cst_37 = arith.constant 0.000000e+00 : f32
    %71 = vector.broadcast %cst_37 : f32 to vector<2x32xf32>
    %72 = arith.maximumf %70, %71 : vector<2x32xf32>
    %c0_38 = arith.constant 0 : index
    %c0_39 = arith.constant 0 : index
    %73 = vector.load %arg12[%c0_38, %c0_39] : memref<32x128xf32, #tpu.memory_space<vmem>>, vector<32x128xf32>
    %cst_40 = arith.constant dense<0.000000e+00> : vector<2x128xf32>
    %74 = tpu.matmul %72, %73, %cst_40 {dimension_numbers = #tpu.dot_dimension_numbers<[1], [0], [0], [1], [0, 0, 1, 1], [], []>} : vector<2x32xf32>, vector<32x128xf32>, vector<2x128xf32> -> vector<2x128xf32>
    %c0_41 = arith.constant 0 : index
    %c0_42 = arith.constant 0 : index
    %75 = vector.load %arg13[%c0_41, %c0_42] : memref<1x128xf32, #tpu.memory_space<vmem>>, vector<1x128xf32>
    %76 = vector.broadcast %75 : vector<1x128xf32> to vector<2x128xf32>
    %77 = arith.addf %74, %76 : vector<2x128xf32>
    %c0_43 = arith.constant 0 : index
    %c0_44 = arith.constant 0 : index
    %78 = vector.load %arg14[%c0_43, %c0_44] : memref<2x128xf32, #tpu.memory_space<vmem>>, vector<2x128xf32>
    tpu.vector_store %arg14[%c0_43, %c0_44], %77 {strides = array<i32>} : memref<2x128xf32, #tpu.memory_space<vmem>>, vector<2x128xf32>,
    return
  }
  func.func @transform_0(%arg0: i32) -> (i32, i32, i32) {
    %c0_i32 = arith.constant 0 : i32
    %c0_i32_0 = arith.constant 0 : i32
    %c0_i32_1 = arith.constant 0 : i32
    return %arg0, %c0_i32, %c0_i32_0 : i32, i32, i32
  }
  func.func @transform_1(%arg0: i32) -> (i32, i32, i32) {
    %c0_i32 = arith.constant 0 : i32
    %c0_i32_0 = arith.constant 0 : i32
    %c0_i32_1 = arith.constant 0 : i32
    return %arg0, %c0_i32, %c0_i32_0 : i32, i32, i32
  }
  func.func @transform_2(%arg0: i32) -> (i32, i32) {
    %c0_i32 = arith.constant 0 : i32
    %c0_i32_0 = arith.constant 0 : i32
    return %arg0, %c0_i32 : i32, i32
  }
  func.func @transform_3(%arg0: i32) -> (i32, i32) {
    %c0_i32 = arith.constant 0 : i32
    %c0_i32_0 = arith.constant 0 : i32
    return %arg0, %c0_i32 : i32, i32
  }
  func.func @transform_4(%arg0: i32) -> (i32, i32) {
    %c0_i32 = arith.constant 0 : i32
    %c0_i32_0 = arith.constant 0 : i32
    %c0_i32_1 = arith.constant 0 : i32
    return %c0_i32, %c0_i32_0 : i32, i32
  }
  func.func @transform_5(%arg0: i32) -> (i32, i32) {
    %c0_i32 = arith.constant 0 : i32
    %c0_i32_0 = arith.constant 0 : i32
    %c0_i32_1 = arith.constant 0 : i32
    return %c0_i32, %c0_i32_0 : i32, i32
  }
  func.func @transform_6(%arg0: i32) -> (i32, i32) {
    %c0_i32 = arith.constant 0 : i32
    %c0_i32_0 = arith.constant 0 : i32
    %c0_i32_1 = arith.constant 0 : i32
    return %c0_i32, %c0_i32_0 : i32, i32
  }
  func.func @transform_7(%arg0: i32) -> (i32, i32) {
    %c0_i32 = arith.constant 0 : i32
    %c0_i32_0 = arith.constant 0 : i32
    %c0_i32_1 = arith.constant 0 : i32
    return %c0_i32, %c0_i32_0 : i32, i32
  }
  func.func @transform_8(%arg0: i32) -> (i32, i32) {
    %c0_i32 = arith.constant 0 : i32
    %c0_i32_0 = arith.constant 0 : i32
    %c0_i32_1 = arith.constant 0 : i32
    return %c0_i32, %c0_i32_0 : i32, i32
  }
  func.func @transform_9(%arg0: i32) -> (i32, i32) {
    %c0_i32 = arith.constant 0 : i32
    %c0_i32_0 = arith.constant 0 : i32
    %c0_i32_1 = arith.constant 0 : i32
    return %c0_i32, %c0_i32_0 : i32, i32
  }
  func.func @transform_10(%arg0: i32) -> (i32, i32) {
    %c0_i32 = arith.constant 0 : i32
    %c0_i32_0 = arith.constant 0 : i32
    %c0_i32_1 = arith.constant 0 : i32
    return %c0_i32, %c0_i32_0 : i32, i32
  }
  func.func @transform_11(%arg0: i32) -> (i32, i32) {
    %c0_i32 = arith.constant 0 : i32
    %c0_i32_0 = arith.constant 0 : i32
    %c0_i32_1 = arith.constant 0 : i32
    return %c0_i32, %c0_i32_0 : i32, i32
  }
  func.func @transform_12(%arg0: i32) -> (i32, i32) {
    %c0_i32 = arith.constant 0 : i32
    %c0_i32_0 = arith.constant 0 : i32
    %c0_i32_1 = arith.constant 0 : i32
    return %c0_i32, %c0_i32_0 : i32, i32
  }
  func.func @transform_13(%arg0: i32) -> (i32, i32) {
    %c0_i32 = arith.constant 0 : i32
    %c0_i32_0 = arith.constant 0 : i32
    return %arg0, %c0_i32 : i32, i32
  }
}

</mosaic_0001>

<llo_original>
// kernel: tpu_custom_call.1
$region0: #{tpu_custom_call.1}
  #allocation0 [shape = 'u32[]', space=smem, size = 0x4, offset = 0x4, fixed_abs, tag = 'smem constant byte address 0x4 - core index']
  #allocation1 [shape = 'u32[144,128]{1,0:T(1,128)}', space=vmem, size = 0x12000, scoped, tag = 'internal scratch']
  %s0 = inlined_call_operand.vmem [shape: f32[2,16,32], index: 0, kind: input, shape index: {}]
  %s1 = inlined_call_operand.hbm [shape: f32[2,8,32], index: 1, kind: input, shape index: {}]
  %s2 = inlined_call_operand.vmem [shape: f32[2,16], index: 2, kind: input, shape index: {}]
  %s3 = inlined_call_operand.hbm [shape: f32[2,8], index: 3, kind: input, shape index: {}]
  %s4 = inlined_call_operand.vmem [shape: f32[32,64], index: 4, kind: input, shape index: {}]
  %s5 = inlined_call_operand.hbm [shape: f32[1,64], index: 5, kind: input, shape index: {}]
  %s6 = inlined_call_operand.vmem [shape: f32[64,4], index: 6, kind: input, shape index: {}]
  %s7 = inlined_call_operand.hbm [shape: f32[1,4], index: 7, kind: input, shape index: {}]
  %s8 = inlined_call_operand.vmem [shape: f32[32,32], index: 8, kind: input, shape index: {}]
  %s9 = inlined_call_operand.hbm [shape: f32[32,32], index: 9, kind: input, shape index: {}]
  %s10 = inlined_call_operand.vmem [shape: f32[1,32], index: 10, kind: input, shape index: {}]
  %s11 = inlined_call_operand.hbm [shape: f32[32,128], index: 11, kind: input, shape index: {}]
  %s12 = inlined_call_operand.vmem [shape: f32[1,128], index: 12, kind: input, shape index: {}]
  %s13 = inlined_call_operand.hbm [shape: f32[2,128], index: 13, kind: output, shape index: {}]
  %s14 = sld [smem:[#allocation0]]
  $region86: #{tpu_custom_call.1} parent=0
    _
  %s16 = ssub.s32 1, %s14
  %s17 = scalar_select 0, %s16, %s14
  $region1: #{tpu_custom_call.1} parent=0
    #allocation2 [shape = 'u8[8192]{0}', space=vmem, size = 0x2000, scoped, tag = 'input window, operand 1, single buffered']
    #allocation3 [shape = 's32[1]{0}', space=sflag, size = 0x4, scoped, tag = 'scoped memory for tpu_custom_call.1']
    #allocation4 [shape = 's32[1]{0}', space=sflag, size = 0x4, scoped, tag = 'scoped memory for tpu_custom_call.1']
    #allocation5 [shape = 'u8[1024]{0}', space=vmem, size = 0x400, scoped, tag = 'input window, operand 3, single buffered']
    #allocation6 [shape = 's32[1]{0}', space=sflag, size = 0x4, scoped, tag = 'scoped memory for tpu_custom_call.1']
    #allocation7 [shape = 'u8[512]{0}', space=vmem, size = 0x400, scoped, tag = 'input window, operand 5, single buffered']
    #allocation8 [shape = 'u8[512]{0}', space=vmem, size = 0x400, scoped, tag = 'input window, operand 7, single buffered']
    #allocation9 [shape = 's32[1]{0}', space=sflag, size = 0x4, scoped, tag = 'scoped memory for tpu_custom_call.1']
    #allocation10 [shape = 'u8[16384]{0}', space=vmem, size = 0x4000, scoped, tag = 'input window, operand 9, single buffered']
    #allocation11 [shape = 'u8[16384]{0}', space=vmem, size = 0x4000, scoped, tag = 'input window, operand 11, single buffered']
    #allocation12 [shape = 's32[1]{0}', space=sflag, size = 0x4, scoped, tag = 'scoped memory for tpu_custom_call.1']
    #allocation13 [shape = 'u8[1024]{0}', space=vmem, size = 0x400, scoped, tag = 'output window, operand 0, single buffered']
    %18 = vsyncpa [#allocation3], 0
    %19 = vsyncpa [#allocation6], 0
    %20 = vsyncpa [#allocation9], 0
    %21 = vsyncpa [#allocation12], 0
    %22 = vsyncpa [#allocation4], 0
    // Predicated region
    $region2: #{tpu_custom_call.1} parent=1 // pred_check
      _
    $region3: #{tpu_custom_call.1} parent=1 // pred_check_branch
      %24 = sbr.rel (0) target = $region5
    $region4: #{tpu_custom_call.1} parent=1 // pred_region
      _
    $region5: #{tpu_custom_call.1} parent=1 // pred_fallthru
      _
    // Predicated region
    $region6: #{tpu_custom_call.1} parent=1 // pred_check
      _
    $region7: #{tpu_custom_call.1} parent=1 // pred_check_branch
      %26 = sbr.rel (0) target = $region9
    $region8: #{tpu_custom_call.1} parent=1 // pred_region
      %s28 = ssub.s32 256, 256
      %29 = vsyncadd [#allocation3], %s28
      %s30 = sshll.u32 [#allocation2], 4
      %s31 = int_to_ptr.vmem [resolvable:$true] %s30
      %36 = dma.hbm_to_vmem [thread:$0]  %s1, 256, %s31, [#allocation3], 128, 128, 8
    $region9: #{tpu_custom_call.1} parent=1 // pred_fallthru
      _
    // Predicated region
    $region10: #{tpu_custom_call.1} parent=1 // pred_check
      _
    $region11: #{tpu_custom_call.1} parent=1 // pred_check_branch
      %38 = sbr.rel (0) target = $region13
    $region12: #{tpu_custom_call.1} parent=1 // pred_region
      _
    $region13: #{tpu_custom_call.1} parent=1 // pred_fallthru
      _
    // Predicated region
    $region14: #{tpu_custom_call.1} parent=1 // pred_check
      _
    $region15: #{tpu_custom_call.1} parent=1 // pred_check_branch
      %40 = sbr.rel (0) target = $region17
    $region16: #{tpu_custom_call.1} parent=1 // pred_region
      %s42 = ssub.s32 32, 32
      %43 = vsyncadd [#allocation6], %s42
      %s45 = sshll.u32 [#allocation5], 4
      %s46 = int_to_ptr.vmem [resolvable:$true] %s45
      %48 = dma.hbm_to_vmem [thread:$0]  %s3, 32, %s46, [#allocation6]
    $region17: #{tpu_custom_call.1} parent=1 // pred_fallthru
      _
    // Predicated region
    $region18: #{tpu_custom_call.1} parent=1 // pred_check
      _
    $region19: #{tpu_custom_call.1} parent=1 // pred_check_branch
      %50 = sbr.rel (0) target = $region21
    $region20: #{tpu_custom_call.1} parent=1 // pred_region
      _
    $region21: #{tpu_custom_call.1} parent=1 // pred_fallthru
      _
    // Predicated region
    $region22: #{tpu_custom_call.1} parent=1 // pred_check
      _
    $region23: #{tpu_custom_call.1} parent=1 // pred_check_branch
      %52 = sbr.rel (0) target = $region25
    $region24: #{tpu_custom_call.1} parent=1 // pred_region
      %s54 = ssub.s32 16, 16
      %55 = vsyncadd [#allocation6], %s54
      %s57 = sshll.u32 [#allocation7], 4
      %s58 = int_to_ptr.vmem [resolvable:$true] %s57
      %60 = dma.hbm_to_vmem [thread:$0]  %s5, 16, %s58, [#allocation6]
    $region25: #{tpu_custom_call.1} parent=1 // pred_fallthru
      _
    // Predicated region
    $region26: #{tpu_custom_call.1} parent=1 // pred_check
      _
    $region27: #{tpu_custom_call.1} parent=1 // pred_check_branch
      %62 = sbr.rel (0) target = $region29
    $region28: #{tpu_custom_call.1} parent=1 // pred_region
      _
    $region29: #{tpu_custom_call.1} parent=1 // pred_fallthru
      _
    // Predicated region
    $region30: #{tpu_custom_call.1} parent=1 // pred_check
      _
    $region31: #{tpu_custom_call.1} parent=1 // pred_check_branch
      %64 = sbr.rel (0) target = $region33
    $region32: #{tpu_custom_call.1} parent=1 // pred_region
      %s66 = ssub.s32 16, 16
      %67 = vsyncadd [#allocation9], %s66
      %s69 = sshll.u32 [#allocation8], 4
      %s70 = int_to_ptr.vmem [resolvable:$true] %s69
      %72 = dma.hbm_to_vmem [thread:$0]  %s7, 16, %s70, [#allocation9]
    $region33: #{tpu_custom_call.1} parent=1 // pred_fallthru
      _
    // Predicated region
    $region34: #{tpu_custom_call.1} parent=1 // pred_check
      _
    $region35: #{tpu_custom_call.1} parent=1 // pred_check_branch
      %74 = sbr.rel (0) target = $region37
    $region36: #{tpu_custom_call.1} parent=1 // pred_region
      _
    $region37: #{tpu_custom_call.1} parent=1 // pred_fallthru
      _
    // Predicated region
    $region38: #{tpu_custom_call.1} parent=1 // pred_check
      _
    $region39: #{tpu_custom_call.1} parent=1 // pred_check_branch
      %76 = sbr.rel (0) target = $region41
    $region40: #{tpu_custom_call.1} parent=1 // pred_region
      %s78 = ssub.s32 512, 512
      %79 = vsyncadd [#allocation9], %s78
      %s80 = sshll.u32 [#allocation10], 4
      %s81 = int_to_ptr.vmem [resolvable:$true] %s80
      %86 = dma.hbm_to_vmem [thread:$0]  %s9, 512, %s81, [#allocation9], 128, 128, 8
    $region41: #{tpu_custom_call.1} parent=1 // pred_fallthru
      _
    // Predicated region
    $region42: #{tpu_custom_call.1} parent=1 // pred_check
      _
    $region43: #{tpu_custom_call.1} parent=1 // pred_check_branch
      %88 = sbr.rel (0) target = $region45
    $region44: #{tpu_custom_call.1} parent=1 // pred_region
      _
    $region45: #{tpu_custom_call.1} parent=1 // pred_fallthru
      _
    // Predicated region
    $region46: #{tpu_custom_call.1} parent=1 // pred_check
      _
    $region47: #{tpu_custom_call.1} parent=1 // pred_check_branch
      %90 = sbr.rel (0) target = $region49
    $region48: #{tpu_custom_call.1} parent=1 // pred_region
      %s92 = ssub.s32 512, 512
      %93 = vsyncadd [#allocation12], %s92
      %s94 = sshll.u32 [#allocation11], 4
      %s95 = int_to_ptr.vmem [resolvable:$true] %s94
      %100 = dma.hbm_to_vmem [thread:$0]  %s11, 512, %s95, [#allocation12], 128, 128, 8
    $region49: #{tpu_custom_call.1} parent=1 // pred_fallthru
      _
    // Predicated region
    $region50: #{tpu_custom_call.1} parent=1 // pred_check
      _
    $region51: #{tpu_custom_call.1} parent=1 // pred_check_branch
      %102 = sbr.rel (0) target = $region53
    $region52: #{tpu_custom_call.1} parent=1 // pred_region
      _
    $region53: #{tpu_custom_call.1} parent=1 // pred_fallthru
      _
    // Predicated region
    $region54: #{tpu_custom_call.1} parent=1 // pred_check
      _
    $region55: #{tpu_custom_call.1} parent=1 // pred_check_branch
      %104 = sbr.rel (0) target = $region57
    $region56: #{tpu_custom_call.1} parent=1 // pred_region
      %105 = dma.done [#allocation3], 256
    $region57: #{tpu_custom_call.1} parent=1 // pred_fallthru
      _
    // Predicated region
    $region58: #{tpu_custom_call.1} parent=1 // pred_check
      _
    $region59: #{tpu_custom_call.1} parent=1 // pred_check_branch
      %107 = sbr.rel (0) target = $region61
    $region60: #{tpu_custom_call.1} parent=1 // pred_region
      %108 = dma.done [#allocation6], 32
    $region61: #{tpu_custom_call.1} parent=1 // pred_fallthru
      _
    // Predicated region
    $region62: #{tpu_custom_call.1} parent=1 // pred_check
      _
    $region63: #{tpu_custom_call.1} parent=1 // pred_check_branch
      %110 = sbr.rel (0) target = $region65
    $region64: #{tpu_custom_call.1} parent=1 // pred_region
      %111 = dma.done [#allocation6], 16
    $region65: #{tpu_custom_call.1} parent=1 // pred_fallthru
      _
    // Predicated region
    $region66: #{tpu_custom_call.1} parent=1 // pred_check
      _
    $region67: #{tpu_custom_call.1} parent=1 // pred_check_branch
      %113 = sbr.rel (0) target = $region69
    $region68: #{tpu_custom_call.1} parent=1 // pred_region
      %114 = dma.done [#allocation9], 16
    $region69: #{tpu_custom_call.1} parent=1 // pred_fallthru
      _
    // Predicated region
    $region70: #{tpu_custom_call.1} parent=1 // pred_check
      _
    $region71: #{tpu_custom_call.1} parent=1 // pred_check_branch
      %116 = sbr.rel (0) target = $region73
    $region72: #{tpu_custom_call.1} parent=1 // pred_region
      %117 = dma.done [#allocation9], 512
    $region73: #{tpu_custom_call.1} parent=1 // pred_fallthru
      _
    // Predicated region
    $region74: #{tpu_custom_call.1} parent=1 // pred_check
      _
    $region75: #{tpu_custom_call.1} parent=1 // pred_check_branch
      %119 = sbr.rel (0) target = $region77
    $region76: #{tpu_custom_call.1} parent=1 // pred_region
      %120 = dma.done [#allocation12], 512
    $region77: #{tpu_custom_call.1} parent=1 // pred_fallthru
      _
    %v121 = vld [vmem:[%s0] sm:$0xff]
    %v122 = vld [vmem:[%s0 + $0x8] sm:$0xff]
    %v123 = vld [vmem:[%s0 + $0x10] sm:$0xff]
    %v124 = vld [vmem:[%s0 + $0x18] sm:$0xff]
    %v125 = vld [vmem:[#allocation2] sm:$0xff]
    %v126 = vld [vmem:[#allocation2 + $0x8] sm:$0xff]
    %v127 = vld [vmem:[%s4] sm:$0xff]
    %v128 = vld [vmem:[%s4 + $0x8] sm:$0xff]
    %v129 = vld [vmem:[%s4 + $0x10] sm:$0xff]
    %v130 = vld [vmem:[%s4 + $0x18] sm:$0xff]
    %v131 = vld [vmem:[#allocation7] sm:$0x1]
    %v133 = vlaneseq
    %v134 = vshrl.u32 %v133, 7
    %v135 = vsub.s32 0, %v134
    %v136 = vrot.slane %v131, %v135
    %vm138 = vcmask 261120
    %v140 = vsel %vm138, %v121, 0
    %v143 = vsel %vm138, %v122, 0
    %v146 = vsel %vm138, %v123, 0
    %v149 = vsel %vm138, %v124, 0
    %v152 = vsel %vm138, %v125, 0
    %v155 = vsel %vm138, %v126, 0
    %157 = vmatprep.subr.mxu0 0.0
    %158 = vmatpush1.msra.mxu0 %v127
    %159 = vmatprep.subr.mxu0 0.0
    %160 = vmatpush1.msra.mxu0 %v128
    %161 = vmatprep.subr.mxu0 0.0
    %162 = vmatpush1.msra.mxu0 %v129
    %163 = vmatprep.subr.mxu0 0.0
    %164 = vmatpush1.msra.mxu0 %v130
    %165 = vmatprep.subr.mxu0 0.0
    %166 = vmatpush1.msra.mxu0 0.0
    %167 = vmatprep.subr.mxu0 0.0
    %168 = vmatpush1.msra.mxu0 0.0
    %169 = vmatprep.subr.mxu0 0.0
    %170 = vmatpush1.msra.mxu0 0.0
    %171 = vmatprep.subr.mxu0 0.0
    %172 = vmatpush1.msra.mxu0 0.0
    %173 = vmatprep.subr.mxu0 0.0
    %174 = vmatpush1.msra.mxu0 0.0
    %175 = vmatprep.subr.mxu0 0.0
    %176 = vmatpush1.msra.mxu0 0.0
    %177 = vmatprep.subr.mxu0 0.0
    %178 = vmatpush1.msra.mxu0 0.0
    %179 = vmatprep.subr.mxu0 0.0
    %180 = vmatpush1.msra.mxu0 0.0
    %181 = vmatprep.subr.mxu0 0.0
    %182 = vmatpush1.msra.mxu0 0.0
    %183 = vmatprep.subr.mxu0 0.0
    %184 = vmatpush1.msra.mxu0 0.0
    %185 = vmatprep.subr.mxu0 0.0
    %186 = vmatpush1.msra.mxu0 0.0
    %187 = vmatprep.subr.mxu0 0.0
    %188 = vmatpush1.msra.mxu0 0.0
    %189 = vmatprep.subr.mxu0 0.0
    %190 = vmatpush1.msra.mxu0 0.0
    %191 = vmatprep.subr.mxu0 0.0
    %192 = vmatpush1.msra.mxu0 0.0
    %193 = vmatprep.subr.mxu0 0.0
    %194 = vmatpush1.msra.mxu0 0.0
    %195 = vmatprep.subr.mxu0 0.0
    %196 = vmatpush1.msra.mxu0 0.0
    %197 = vmatprep.subr.mxu0 0.0
    %198 = vmatpush1.msra.mxu0 0.0
    %199 = vmatprep.subr.mxu0 0.0
    %200 = vmatpush1.msra.mxu0 0.0
    %201 = vmatprep.subr.mxu0 0.0
    %202 = vmatpush1.msra.mxu0 0.0
    %203 = vmatprep.subr.mxu0 0.0
    %204 = vmatpush1.msra.mxu0 0.0
    %205 = vmatprep.subr.mxu0 0.0
    %206 = vmatpush1.msra.mxu0 0.0
    %207 = vmatprep.subr.mxu0 0.0
    %208 = vmatpush1.msra.mxu0 0.0
    %209 = vmatprep.subr.mxu0 0.0
    %210 = vmatpush1.msra.mxu0 0.0
    %211 = vmatprep.subr.mxu0 0.0
    %212 = vmatpush1.msra.mxu0 0.0
    %213 = vmatprep.subr.mxu0 0.0
    %214 = vmatpush1.msra.mxu0 0.0
    %215 = vmatprep.subr.mxu0 0.0
    %216 = vmatpush1.msra.mxu0 0.0
    %217 = vmatprep.subr.mxu0 0.0
    %218 = vmatpush1.msra.mxu0 0.0
    %219 = vmatprep.subr.mxu0 0.0
    %220 = vmatpush1.msra.mxu0 0.0
    %221 = vmatprep.mubr.f32.mxu0 0.0
    %222 = vmatmul.mubr.f32.gmra.mrb[0].mxu0 %v140
    %v223 = vpop.f32.mrb[0].mxu0
    %v224 = vadd.f32 %v136, %v223
    %v225 = vpop.f32.mrb[0].mxu0
    %226 = vmatprep.mubr.f32.mxu0 0.0
    %227 = vmatmul.mubr.f32.gmra.mrb[0].mxu0 %v143
    %v228 = vpop.f32.mrb[0].mxu0
    %v229 = vadd.f32 %v136, %v228
    %v230 = vpop.f32.mrb[0].mxu0
    %231 = vmatprep.mubr.f32.mxu0 0.0
    %232 = vmatmul.mubr.f32.gmra.mrb[0].mxu0 %v146
    %v233 = vpop.f32.mrb[0].mxu0
    %v234 = vadd.f32 %v136, %v233
    %v235 = vpop.f32.mrb[0].mxu0
    %236 = vmatprep.mubr.f32.mxu0 0.0
    %237 = vmatmul.mubr.f32.gmra.mrb[0].mxu0 %v149
    %v238 = vpop.f32.mrb[0].mxu0
    %v239 = vadd.f32 %v136, %v238
    %v240 = vpop.f32.mrb[0].mxu0
    %241 = vmatprep.mubr.f32.mxu0 0.0
    %242 = vmatmul.mubr.f32.gmra.mrb[0].mxu0 %v152
    %v243 = vpop.f32.mrb[0].mxu0
    %v244 = vadd.f32 %v136, %v243
    %v245 = vpop.f32.mrb[0].mxu0
    %246 = vmatprep.mubr.f32.mxu0 0.0
    %247 = vmatmul.mubr.f32.gmra.mrb[0].mxu0 %v155
    %v248 = vpop.f32.mrb[0].mxu0
    %v249 = vadd.f32 %v136, %v248
    %v250 = vpop.f32.mrb[0].mxu0
    %251 = vdwg.mxu0
    %v252 = vmax.f32 %v224, 0.0
    %v253 = vmax.f32 %v229, 0.0
    %v254 = vmax.f32 %v234, 0.0
    %v255 = vmax.f32 %v239, 0.0
    %v256 = vmax.f32 %v244, 0.0
    %v257 = vmax.f32 %v249, 0.0
    %v258 = vld [vmem:[%s6] sm:$0xff]
    %v259 = vld [vmem:[%s6 + $0x8] sm:$0xff]
    %v260 = vld [vmem:[%s6 + $0x10] sm:$0xff]
    %v261 = vld [vmem:[%s6 + $0x18] sm:$0xff]
    %v262 = vld [vmem:[%s6 + $0x20] sm:$0xff]
    %v263 = vld [vmem:[%s6 + $0x28] sm:$0xff]
    %v264 = vld [vmem:[%s6 + $0x30] sm:$0xff]
    %v265 = vld [vmem:[%s6 + $0x38] sm:$0xff]
    %v266 = vld [vmem:[#allocation8] sm:$0x1]
    %v268 = vlaneseq
    %v269 = vshrl.u32 %v268, 7
    %v270 = vsub.s32 0, %v269
    %v271 = vrot.slane %v266, %v270
    %vm273 = vcmask 523264
    %v275 = vsel %vm273, %v252, 0
    %v278 = vsel %vm273, %v253, 0
    %v281 = vsel %vm273, %v254, 0
    %v284 = vsel %vm273, %v255, 0
    %v287 = vsel %vm273, %v256, 0
    %v290 = vsel %vm273, %v257, 0
    %292 = vmatprep.subr.mxu0 0.0
    %293 = vmatpush1.msra.mxu0 %v258
    %294 = vmatprep.subr.mxu0 0.0
    %295 = vmatpush1.msra.mxu0 %v259
    %296 = vmatprep.subr.mxu0 0.0
    %297 = vmatpush1.msra.mxu0 %v260
    %298 = vmatprep.subr.mxu0 0.0
    %299 = vmatpush1.msra.mxu0 %v261
    %300 = vmatprep.subr.mxu0 0.0
    %301 = vmatpush1.msra.mxu0 %v262
    %302 = vmatprep.subr.mxu0 0.0
    %303 = vmatpush1.msra.mxu0 %v263
    %304 = vmatprep.subr.mxu0 0.0
    %305 = vmatpush1.msra.mxu0 %v264
    %306 = vmatprep.subr.mxu0 0.0
    %307 = vmatpush1.msra.mxu0 %v265
    %308 = vmatprep.subr.mxu0 0.0
    %309 = vmatpush1.msra.mxu0 0.0
    %310 = vmatprep.subr.mxu0 0.0
    %311 = vmatpush1.msra.mxu0 0.0
    %312 = vmatprep.subr.mxu0 0.0
    %313 = vmatpush1.msra.mxu0 0.0
    %314 = vmatprep.subr.mxu0 0.0
    %315 = vmatpush1.msra.mxu0 0.0
    %316 = vmatprep.subr.mxu0 0.0
    %317 = vmatpush1.msra.mxu0 0.0
    %318 = vmatprep.subr.mxu0 0.0
    %319 = vmatpush1.msra.mxu0 0.0
    %320 = vmatprep.subr.mxu0 0.0
    %321 = vmatpush1.msra.mxu0 0.0
    %322 = vmatprep.subr.mxu0 0.0
    %323 = vmatpush1.msra.mxu0 0.0
    %324 = vmatprep.subr.mxu0 0.0
    %325 = vmatpush1.msra.mxu0 0.0
    %326 = vmatprep.subr.mxu0 0.0
    %327 = vmatpush1.msra.mxu0 0.0
    %328 = vmatprep.subr.mxu0 0.0
    %329 = vmatpush1.msra.mxu0 0.0
    %330 = vmatprep.subr.mxu0 0.0
    %331 = vmatpush1.msra.mxu0 0.0
    %332 = vmatprep.subr.mxu0 0.0
    %333 = vmatpush1.msra.mxu0 0.0
    %334 = vmatprep.subr.mxu0 0.0
    %335 = vmatpush1.msra.mxu0 0.0
    %336 = vmatprep.subr.mxu0 0.0
    %337 = vmatpush1.msra.mxu0 0.0
    %338 = vmatprep.subr.mxu0 0.0
    %339 = vmatpush1.msra.mxu0 0.0
    %340 = vmatprep.subr.mxu0 0.0
    %341 = vmatpush1.msra.mxu0 0.0
    %342 = vmatprep.subr.mxu0 0.0
    %343 = vmatpush1.msra.mxu0 0.0
    %344 = vmatprep.subr.mxu0 0.0
    %345 = vmatpush1.msra.mxu0 0.0
    %346 = vmatprep.subr.mxu0 0.0
    %347 = vmatpush1.msra.mxu0 0.0
    %348 = vmatprep.subr.mxu0 0.0
    %349 = vmatpush1.msra.mxu0 0.0
    %350 = vmatprep.subr.mxu0 0.0
    %351 = vmatpush1.msra.mxu0 0.0
    %352 = vmatprep.subr.mxu0 0.0
    %353 = vmatpush1.msra.mxu0 0.0
    %354 = vmatprep.subr.mxu0 0.0
    %355 = vmatpush1.msra.mxu0 0.0
    %356 = vmatprep.mubr.f32.mxu0 0.0
    %357 = vmatmul.mubr.f32.gmra.mrb[0].mxu0 %v275
    %v358 = vpop.f32.mrb[0].mxu0
    %v359 = vadd.f32 %v271, %v358
    %v360 = vpop.f32.mrb[0].mxu0
    %361 = vmatprep.mubr.f32.mxu0 0.0
    %362 = vmatmul.mubr.f32.gmra.mrb[0].mxu0 %v278
    %v363 = vpop.f32.mrb[0].mxu0
    %v364 = vadd.f32 %v271, %v363
    %v365 = vpop.f32.mrb[0].mxu0
    %366 = vmatprep.mubr.f32.mxu0 0.0
    %367 = vmatmul.mubr.f32.gmra.mrb[0].mxu0 %v281
    %v368 = vpop.f32.mrb[0].mxu0
    %v369 = vadd.f32 %v271, %v368
    %v370 = vpop.f32.mrb[0].mxu0
    %371 = vmatprep.mubr.f32.mxu0 0.0
    %372 = vmatmul.mubr.f32.gmra.mrb[0].mxu0 %v284
    %v373 = vpop.f32.mrb[0].mxu0
    %v374 = vadd.f32 %v271, %v373
    %v375 = vpop.f32.mrb[0].mxu0
    %376 = vmatprep.mubr.f32.mxu0 0.0
    %377 = vmatmul.mubr.f32.gmra.mrb[0].mxu0 %v287
    %v378 = vpop.f32.mrb[0].mxu0
    %v379 = vadd.f32 %v271, %v378
    %v380 = vpop.f32.mrb[0].mxu0
    %381 = vmatprep.mubr.f32.mxu0 0.0
    %382 = vmatmul.mubr.f32.gmra.mrb[0].mxu0 %v290
    %v383 = vpop.f32.mrb[0].mxu0
    %v384 = vadd.f32 %v271, %v383
    %v385 = vpop.f32.mrb[0].mxu0
    %386 = vdwg.mxu0
    %v387 = vld [vmem:[%s2] sm:$0x3]
    %v388 = vlaneseq
    %v389 = vshrl.u32 %v388, 7
    %v390 = vsub.s32 0, %v389
    %v391 = vrot.slane %v387, %v390
    %393 = vbcast.lane.b32.xlu0 %v391, 256
    %v394 = vpop.permute.xlu0 %393
    %s396 = sor.u32 256, 8
    %397 = vbcast.lane.b32.xlu0 %v391, %s396
    %v398 = vpop.permute.xlu0 %397
    %v399 = vlaneseq
    %v400 = vshrl.u32 %v399, 7
    %v401 = vsub.s32 1, %v400
    %v402 = vrot.slane %v387, %v401
    %404 = vbcast.lane.b32.xlu0 %v402, 256
    %v405 = vpop.permute.xlu0 %404
    %s407 = sor.u32 256, 8
    %408 = vbcast.lane.b32.xlu0 %v402, %s407
    %v409 = vpop.permute.xlu0 %408
    %v410 = vadd.f32 %v359, %v394
    %v411 = vadd.f32 %v364, %v398
    %v412 = vadd.f32 %v369, %v405
    %v413 = vadd.f32 %v374, %v409
    %vm414 = vcmask 15360
    %v415 = vsel %vm414, %v410, -inf
    %v416 = vsel %vm414, %v411, -inf
    %v417 = vmax.f32 %v415, %v416
    %v418 = vrot.slane %v417, 4
    %v419 = vmax.f32 %v417, %v418
    %v420 = vrot.slane %v419, 2
    %v421 = vmax.f32 %v419, %v420
    %v422 = vrot.slane %v421, 1
    %v423 = vmax.f32 %v421, %v422
    %v424 = vsel %vm414, %v412, -inf
    %v425 = vsel %vm414, %v413, -inf
    %v426 = vmax.f32 %v424, %v425
    %v427 = vrot.slane %v426, 4
    %v428 = vmax.f32 %v426, %v427
    %v429 = vrot.slane %v428, 2
    %v430 = vmax.f32 %v428, %v429
    %v431 = vrot.slane %v430, 1
    %v432 = vmax.f32 %v430, %v431
    %v433 = vsub.f32 %v410, %v423
    %v434 = vsub.f32 %v411, %v423
    %v435 = vsub.f32 %v412, %v432
    %v436 = vsub.f32 %v413, %v432
    %v437 = vmul.f32 %v433, 1.442695
    %v438 = vpow.pop %v437
    %v439 = vmul.f32 %v434, 1.442695
    %v440 = vpow.pop %v439
    %v441 = vmul.f32 %v435, 1.442695
    %v442 = vpow.pop %v441
    %v443 = vmul.f32 %v436, 1.442695
    %v444 = vpow.pop %v443
    %v445 = vsel %vm414, %v438, 0.0
    %v446 = vsel %vm414, %v440, 0.0
    %v447 = vadd.f32 %v445, %v446
    %v448 = vrot.slane %v447, 4
    %v449 = vadd.f32 %v447, %v448
    %v450 = vrot.slane %v449, 2
    %v451 = vadd.f32 %v449, %v450
    %v452 = vrot.slane %v451, 1
    %v453 = vadd.f32 %v451, %v452
    %v454 = vsel %vm414, %v442, 0.0
    %v455 = vsel %vm414, %v444, 0.0
    %v456 = vadd.f32 %v454, %v455
    %v457 = vrot.slane %v456, 4
    %v458 = vadd.f32 %v456, %v457
    %v459 = vrot.slane %v458, 2
    %v460 = vadd.f32 %v458, %v459
    %v461 = vrot.slane %v460, 1
    %v462 = vadd.f32 %v460, %v461
    %v463 = vrcp.pop %v453
    %v464 = vrcp.pop %v462
    %v465 = vmul.f32 %v438, %v463
    %v466 = vmul.f32 %v440, %v463
    %v467 = vmul.f32 %v442, %v464
    %v468 = vmul.f32 %v444, %v464
    %v469 = vsel %vm414, %v465, 0.0
    %470 = vadd.xlane.f32.xlu0 %v469
    %v471 = vpop.xlane.xlu0 %470
    %v472 = vsel %vm414, %v466, 0.0
    %473 = vadd.xlane.f32.xlu0 %v472
    %v474 = vpop.xlane.xlu0 %473
    %v475 = vsel %vm414, %v467, 0.0
    %476 = vadd.xlane.f32.xlu0 %v475
    %v477 = vpop.xlane.xlu0 %476
    %v478 = vsel %vm414, %v468, 0.0
    %479 = vadd.xlane.f32.xlu0 %v478
    %v480 = vpop.xlane.xlu0 %479
    %v481 = vrcp.pop 2.0
    %v482 = vmul.f32 %v471, %v481
    %v483 = vmul.f32 %v474, %v481
    %v484 = vmul.f32 %v477, %v481
    %v485 = vmul.f32 %v480, %v481
    %v486 = vmul.f32 %v482, %v121
    %v487 = vmul.f32 %v483, %v122
    %v488 = vmul.f32 %v484, %v123
    %v489 = vmul.f32 %v485, %v124
    %v490 = vsel %vm138, %v486, 0.0
    %v491 = vsel %vm138, %v487, 0.0
    %v492 = vadd.f32 %v490, %v491
    %v493 = vrot.slane %v492, 4
    %v494 = vadd.f32 %v492, %v493
    %v495 = vrot.slane %v494, 2
    %v496 = vadd.f32 %v494, %v495
    %v497 = vrot.slane %v496, 1
    %v498 = vadd.f32 %v496, %v497
    %v499 = vsel %vm138, %v488, 0.0
    %v500 = vsel %vm138, %v489, 0.0
    %v501 = vadd.f32 %v499, %v500
    %v502 = vrot.slane %v501, 4
    %v503 = vadd.f32 %v501, %v502
    %v504 = vrot.slane %v503, 2
    %v505 = vadd.f32 %v503, %v504
    %v506 = vrot.slane %v505, 1
    %v507 = vadd.f32 %v505, %v506
    %v508 = vld [vmem:[#allocation5] sm:$0x3]
    %v509 = vlaneseq
    %v510 = vshrl.u32 %v509, 7
    %v511 = vsub.s32 0, %v510
    %v512 = vrot.slane %v508, %v511
    %514 = vbcast.lane.b32.xlu0 %v512, 256
    %v515 = vpop.permute.xlu0 %514
    %v516 = vlaneseq
    %v517 = vshrl.u32 %v516, 7
    %v518 = vsub.s32 1, %v517
    %v519 = vrot.slane %v508, %v518
    %521 = vbcast.lane.b32.xlu0 %v519, 256
    %v522 = vpop.permute.xlu0 %521
    %v523 = vadd.f32 %v379, %v515
    %v524 = vadd.f32 %v384, %v522
    %vm525 = vcmask 31760
    %v526 = vsel %vm525, %v523, -inf
    %v527 = vrot.slane %v526, 4
    %v528 = vmax.f32 %v526, %v527
    %v529 = vrot.slane %v528, 2
    %v530 = vmax.f32 %v528, %v529
    %v531 = vrot.slane %v530, 1
    %v532 = vmax.f32 %v530, %v531
    %v533 = vsel %vm525, %v524, -inf
    %v534 = vrot.slane %v533, 4
    %v535 = vmax.f32 %v533, %v534
    %v536 = vrot.slane %v535, 2
    %v537 = vmax.f32 %v535, %v536
    %v538 = vrot.slane %v537, 1
    %v539 = vmax.f32 %v537, %v538
    %v540 = vsub.f32 %v523, %v532
    %v541 = vsub.f32 %v524, %v539
    %v542 = vmul.f32 %v540, 1.442695
    %v543 = vpow.pop %v542
    %v544 = vmul.f32 %v541, 1.442695
    %v545 = vpow.pop %v544
    %v546 = vsel %vm525, %v543, 0.0
    %v547 = vrot.slane %v546, 4
    %v548 = vadd.f32 %v546, %v547
    %v549 = vrot.slane %v548, 2
    %v550 = vadd.f32 %v548, %v549
    %v551 = vrot.slane %v550, 1
    %v552 = vadd.f32 %v550, %v551
    %v553 = vsel %vm525, %v545, 0.0
    %v554 = vrot.slane %v553, 4
    %v555 = vadd.f32 %v553, %v554
    %v556 = vrot.slane %v555, 2
    %v557 = vadd.f32 %v555, %v556
    %v558 = vrot.slane %v557, 1
    %v559 = vadd.f32 %v557, %v558
    %v560 = vrcp.pop %v552
    %v561 = vrcp.pop %v559
    %v562 = vmul.f32 %v543, %v560
    %v563 = vmul.f32 %v545, %v561
    %566 = vrot.lane.b32.xlu0 %v562, 126
    %v567 = vpop.permute.xlu0 %566
    %568 = vrot.lane.b32.xlu0 %v563, 126
    %v569 = vpop.permute.xlu0 %568
    %v572 = vsel %vm414, %v567, 0.0
    %573 = vadd.xlane.f32.xlu0 %v572
    %v574 = vpop.xlane.xlu0 %573
    %v575 = vsel %vm414, %v569, 0.0
    %576 = vadd.xlane.f32.xlu0 %v575
    %v577 = vpop.xlane.xlu0 %576
    %v578 = vmul.f32 %v574, %v481
    %v579 = vmul.f32 %v577, %v481
    %v580 = vmul.f32 %v578, %v125
    %v581 = vmul.f32 %v579, %v126
    %v582 = vsel %vm138, %v580, 0.0
    %v583 = vrot.slane %v582, 4
    %v584 = vadd.f32 %v582, %v583
    %v585 = vrot.slane %v584, 2
    %v586 = vadd.f32 %v584, %v585
    %v587 = vrot.slane %v586, 1
    %v588 = vadd.f32 %v586, %v587
    %v589 = vsel %vm138, %v581, 0.0
    %v590 = vrot.slane %v589, 4
    %v591 = vadd.f32 %v589, %v590
    %v592 = vrot.slane %v591, 2
    %v593 = vadd.f32 %v591, %v592
    %v594 = vrot.slane %v593, 1
    %v595 = vadd.f32 %v593, %v594
    %v596 = vld [vmem:[%s8] sm:$0xff]
    %v597 = vld [vmem:[%s8 + $0x8] sm:$0xff]
    %v598 = vld [vmem:[%s8 + $0x10] sm:$0xff]
    %v599 = vld [vmem:[%s8 + $0x18] sm:$0xff]
    %v600 = vld [vmem:[#allocation10] sm:$0xff]
    %v601 = vld [vmem:[#allocation10 + $0x8] sm:$0xff]
    %v602 = vld [vmem:[#allocation10 + $0x10] sm:$0xff]
    %v603 = vld [vmem:[#allocation10 + $0x18] sm:$0xff]
    %vm606 = vcmask 1041409
    %v607 = vsel %vm606, %v595, %v588
    %v608 = vsel %vm138, %v607, 0
    %610 = vmatprep.subr.mxu0 0.0
    %611 = vmatpush1.msra.mxu0 %v600
    %612 = vmatprep.subr.mxu0 0.0
    %613 = vmatpush1.msra.mxu0 %v601
    %614 = vmatprep.subr.mxu0 0.0
    %615 = vmatpush1.msra.mxu0 %v602
    %616 = vmatprep.subr.mxu0 0.0
    %617 = vmatpush1.msra.mxu0 %v603
    %618 = vmatprep.subr.mxu0 0.0
    %619 = vmatpush1.msra.mxu0 0.0
    %620 = vmatprep.subr.mxu0 0.0
    %621 = vmatpush1.msra.mxu0 0.0
    %622 = vmatprep.subr.mxu0 0.0
    %623 = vmatpush1.msra.mxu0 0.0
    %624 = vmatprep.subr.mxu0 0.0
    %625 = vmatpush1.msra.mxu0 0.0
    %626 = vmatprep.subr.mxu0 0.0
    %627 = vmatpush1.msra.mxu0 0.0
    %628 = vmatprep.subr.mxu0 0.0
    %629 = vmatpush1.msra.mxu0 0.0
    %630 = vmatprep.subr.mxu0 0.0
    %631 = vmatpush1.msra.mxu0 0.0
    %632 = vmatprep.subr.mxu0 0.0
    %633 = vmatpush1.msra.mxu0 0.0
    %634 = vmatprep.subr.mxu0 0.0
    %635 = vmatpush1.msra.mxu0 0.0
    %636 = vmatprep.subr.mxu0 0.0
    %637 = vmatpush1.msra.mxu0 0.0
    %638 = vmatprep.subr.mxu0 0.0
    %639 = vmatpush1.msra.mxu0 0.0
    %640 = vmatprep.subr.mxu0 0.0
    %641 = vmatpush1.msra.mxu0 0.0
    %642 = vmatprep.subr.mxu0 0.0
    %643 = vmatpush1.msra.mxu0 0.0
    %644 = vmatprep.subr.mxu0 0.0
    %645 = vmatpush1.msra.mxu0 0.0
    %646 = vmatprep.subr.mxu0 0.0
    %647 = vmatpush1.msra.mxu0 0.0
    %648 = vmatprep.subr.mxu0 0.0
    %649 = vmatpush1.msra.mxu0 0.0
    %650 = vmatprep.subr.mxu0 0.0
    %651 = vmatpush1.msra.mxu0 0.0
    %652 = vmatprep.subr.mxu0 0.0
    %653 = vmatpush1.msra.mxu0 0.0
    %654 = vmatprep.subr.mxu0 0.0
    %655 = vmatpush1.msra.mxu0 0.0
    %656 = vmatprep.subr.mxu0 0.0
    %657 = vmatpush1.msra.mxu0 0.0
    %658 = vmatprep.subr.mxu0 0.0
    %659 = vmatpush1.msra.mxu0 0.0
    %660 = vmatprep.subr.mxu0 0.0
    %661 = vmatpush1.msra.mxu0 0.0
    %662 = vmatprep.subr.mxu0 0.0
    %663 = vmatpush1.msra.mxu0 0.0
    %664 = vmatprep.subr.mxu0 0.0
    %665 = vmatpush1.msra.mxu0 0.0
    %666 = vmatprep.subr.mxu0 0.0
    %667 = vmatpush1.msra.mxu0 0.0
    %668 = vmatprep.subr.mxu0 0.0
    %669 = vmatpush1.msra.mxu0 0.0
    %670 = vmatprep.subr.mxu0 0.0
    %671 = vmatpush1.msra.mxu0 0.0
    %672 = vmatprep.subr.mxu0 0.0
    %673 = vmatpush1.msra.mxu0 0.0
    %674 = vmatprep.mubr.f32.mxu0 0.0
    %675 = vmatmul.mubr.f32.gmra.mrb[0].mxu0 %v608
    %v676 = vpop.f32.mrb[0].mxu0
    %v677 = vadd.f32 0.0, %v676
    %v678 = vpop.f32.mrb[0].mxu0
    %679 = vdwg.mxu0
    %v682 = vsel %vm606, %v507, %v498
    %v683 = vsel %vm138, %v682, 0
    %685 = vmatprep.subr.mxu0 0.0
    %686 = vmatpush1.msra.mxu0 %v596
    %687 = vmatprep.subr.mxu0 0.0
    %688 = vmatpush1.msra.mxu0 %v597
    %689 = vmatprep.subr.mxu0 0.0
    %690 = vmatpush1.msra.mxu0 %v598
    %691 = vmatprep.subr.mxu0 0.0
    %692 = vmatpush1.msra.mxu0 %v599
    %693 = vmatprep.subr.mxu0 0.0
    %694 = vmatpush1.msra.mxu0 0.0
    %695 = vmatprep.subr.mxu0 0.0
    %696 = vmatpush1.msra.mxu0 0.0
    %697 = vmatprep.subr.mxu0 0.0
    %698 = vmatpush1.msra.mxu0 0.0
    %699 = vmatprep.subr.mxu0 0.0
    %700 = vmatpush1.msra.mxu0 0.0
    %701 = vmatprep.subr.mxu0 0.0
    %702 = vmatpush1.msra.mxu0 0.0
    %703 = vmatprep.subr.mxu0 0.0
    %704 = vmatpush1.msra.mxu0 0.0
    %705 = vmatprep.subr.mxu0 0.0
    %706 = vmatpush1.msra.mxu0 0.0
    %707 = vmatprep.subr.mxu0 0.0
    %708 = vmatpush1.msra.mxu0 0.0
    %709 = vmatprep.subr.mxu0 0.0
    %710 = vmatpush1.msra.mxu0 0.0
    %711 = vmatprep.subr.mxu0 0.0
    %712 = vmatpush1.msra.mxu0 0.0
    %713 = vmatprep.subr.mxu0 0.0
    %714 = vmatpush1.msra.mxu0 0.0
    %715 = vmatprep.subr.mxu0 0.0
    %716 = vmatpush1.msra.mxu0 0.0
    %717 = vmatprep.subr.mxu0 0.0
    %718 = vmatpush1.msra.mxu0 0.0
    %719 = vmatprep.subr.mxu0 0.0
    %720 = vmatpush1.msra.mxu0 0.0
    %721 = vmatprep.subr.mxu0 0.0
    %722 = vmatpush1.msra.mxu0 0.0
    %723 = vmatprep.subr.mxu0 0.0
    %724 = vmatpush1.msra.mxu0 0.0
    %725 = vmatprep.subr.mxu0 0.0
    %726 = vmatpush1.msra.mxu0 0.0
    %727 = vmatprep.subr.mxu0 0.0
    %728 = vmatpush1.msra.mxu0 0.0
    %729 = vmatprep.subr.mxu0 0.0
    %730 = vmatpush1.msra.mxu0 0.0
    %731 = vmatprep.subr.mxu0 0.0
    %732 = vmatpush1.msra.mxu0 0.0
    %733 = vmatprep.subr.mxu0 0.0
    %734 = vmatpush1.msra.mxu0 0.0
    %735 = vmatprep.subr.mxu0 0.0
    %736 = vmatpush1.msra.mxu0 0.0
    %737 = vmatprep.subr.mxu0 0.0
    %738 = vmatpush1.msra.mxu0 0.0
    %739 = vmatprep.subr.mxu0 0.0
    %740 = vmatpush1.msra.mxu0 0.0
    %741 = vmatprep.subr.mxu0 0.0
    %742 = vmatpush1.msra.mxu0 0.0
    %743 = vmatprep.subr.mxu0 0.0
    %744 = vmatpush1.msra.mxu0 0.0
    %745 = vmatprep.subr.mxu0 0.0
    %746 = vmatpush1.msra.mxu0 0.0
    %747 = vmatprep.subr.mxu0 0.0
    %748 = vmatpush1.msra.mxu0 0.0
    %749 = vmatprep.mubr.f32.mxu0 0.0
    %750 = vmatmul.mubr.f32.gmra.mrb[0].mxu0 %v683
    %v751 = vpop.f32.mrb[0].mxu0
    %v752 = vadd.f32 %v677, %v751
    %v753 = vpop.f32.mrb[0].mxu0
    %754 = vdwg.mxu0
    %v755 = vld [vmem:[%s10] sm:$0x1]
    %v757 = vlaneseq
    %v758 = vshrl.u32 %v757, 7
    %v759 = vsub.s32 0, %v758
    %v760 = vrot.slane %v755, %v759
    %v762 = vadd.f32 %v752, %v760
    %v763 = vmax.f32 %v762, 0.0
    %v764 = vld [vmem:[#allocation11] sm:$0xff]
    %v765 = vld [vmem:[#allocation11 + $0x8] sm:$0xff]
    %v766 = vld [vmem:[#allocation11 + $0x10] sm:$0xff]
    %v767 = vld [vmem:[#allocation11 + $0x18] sm:$0xff]
    %v768 = vld [vmem:[%s12] sm:$0x1]
    %v770 = vlaneseq
    %v771 = vshrl.u32 %v770, 7
    %v772 = vsub.s32 0, %v771
    %v773 = vrot.slane %v768, %v772
    %v776 = vsel %vm138, %v763, 0
    %778 = vmatprep.subr.mxu0 0.0
    %779 = vmatpush1.msra.mxu0 %v764
    %780 = vmatprep.subr.mxu0 0.0
    %781 = vmatpush1.msra.mxu0 %v765
    %782 = vmatprep.subr.mxu0 0.0
    %783 = vmatpush1.msra.mxu0 %v766
    %784 = vmatprep.subr.mxu0 0.0
    %785 = vmatpush1.msra.mxu0 %v767
    %786 = vmatprep.subr.mxu0 0.0
    %787 = vmatpush1.msra.mxu0 0.0
    %788 = vmatprep.subr.mxu0 0.0
    %789 = vmatpush1.msra.mxu0 0.0
    %790 = vmatprep.subr.mxu0 0.0
    %791 = vmatpush1.msra.mxu0 0.0
    %792 = vmatprep.subr.mxu0 0.0
    %793 = vmatpush1.msra.mxu0 0.0
    %794 = vmatprep.subr.mxu0 0.0
    %795 = vmatpush1.msra.mxu0 0.0
    %796 = vmatprep.subr.mxu0 0.0
    %797 = vmatpush1.msra.mxu0 0.0
    %798 = vmatprep.subr.mxu0 0.0
    %799 = vmatpush1.msra.mxu0 0.0
    %800 = vmatprep.subr.mxu0 0.0
    %801 = vmatpush1.msra.mxu0 0.0
    %802 = vmatprep.subr.mxu0 0.0
    %803 = vmatpush1.msra.mxu0 0.0
    %804 = vmatprep.subr.mxu0 0.0
    %805 = vmatpush1.msra.mxu0 0.0
    %806 = vmatprep.subr.mxu0 0.0
    %807 = vmatpush1.msra.mxu0 0.0
    %808 = vmatprep.subr.mxu0 0.0
    %809 = vmatpush1.msra.mxu0 0.0
    %810 = vmatprep.subr.mxu0 0.0
    %811 = vmatpush1.msra.mxu0 0.0
    %812 = vmatprep.subr.mxu0 0.0
    %813 = vmatpush1.msra.mxu0 0.0
    %814 = vmatprep.subr.mxu0 0.0
    %815 = vmatpush1.msra.mxu0 0.0
    %816 = vmatprep.subr.mxu0 0.0
    %817 = vmatpush1.msra.mxu0 0.0
    %818 = vmatprep.subr.mxu0 0.0
    %819 = vmatpush1.msra.mxu0 0.0
    %820 = vmatprep.subr.mxu0 0.0
    %821 = vmatpush1.msra.mxu0 0.0
    %822 = vmatprep.subr.mxu0 0.0
    %823 = vmatpush1.msra.mxu0 0.0
    %824 = vmatprep.subr.mxu0 0.0
    %825 = vmatpush1.msra.mxu0 0.0
    %826 = vmatprep.subr.mxu0 0.0
    %827 = vmatpush1.msra.mxu0 0.0
    %828 = vmatprep.subr.mxu0 0.0
    %829 = vmatpush1.msra.mxu0 0.0
    %830 = vmatprep.subr.mxu0 0.0
    %831 = vmatpush1.msra.mxu0 0.0
    %832 = vmatprep.subr.mxu0 0.0
    %833 = vmatpush1.msra.mxu0 0.0
    %834 = vmatprep.subr.mxu0 0.0
    %835 = vmatpush1.msra.mxu0 0.0
    %836 = vmatprep.subr.mxu0 0.0
    %837 = vmatpush1.msra.mxu0 0.0
    %838 = vmatprep.subr.mxu0 0.0
    %839 = vmatpush1.msra.mxu0 0.0
    %840 = vmatprep.subr.mxu0 0.0
    %841 = vmatpush1.msra.mxu0 0.0
    %842 = vmatprep.mubr.f32.mxu0 0.0
    %843 = vmatmul.mubr.f32.gmra.mrb[0].mxu0 %v776
    %v844 = vpop.f32.mrb[0].mxu0
    %v845 = vadd.f32 %v773, %v844
    %v846 = vpop.f32.mrb[0].mxu0
    %847 = vdwg.mxu0
    %848 = vst [vmem:[#allocation13] sm:$0x3] %v845
    // Predicated region
    $region78: #{tpu_custom_call.1} parent=1 // pred_check
      _
    $region79: #{tpu_custom_call.1} parent=1 // pred_check_branch
      %850 = sbr.rel (0) target = $region81
    $region80: #{tpu_custom_call.1} parent=1 // pred_region
      %s852 = ssub.s32 32, 32
      %853 = vsyncadd [#allocation4], %s852
      %s855 = sshll.u32 [#allocation13], 4
      %s856 = int_to_ptr.vmem [resolvable:$true] %s855
      %858 = dma.vmem_to_hbm [thread:$0]  %s856, 32, %s13, [#allocation4]
    $region81: #{tpu_custom_call.1} parent=1 // pred_fallthru
      _
    // Predicated region
    $region82: #{tpu_custom_call.1} parent=1 // pred_check
      _
    $region83: #{tpu_custom_call.1} parent=1 // pred_check_branch
      %860 = sbr.rel (0) target = $region85
    $region84: #{tpu_custom_call.1} parent=1 // pred_region
      %861 = dma.done [#allocation4], 32
    $region85: #{tpu_custom_call.1} parent=1 // pred_fallthru
      _
    %862 = vsyncpa [#allocation3], 1
    %863 = vsyncpa [#allocation6], 1
    %864 = vsyncpa [#allocation9], 1
    %865 = vsyncpa [#allocation12], 1
    %866 = vsyncpa [#allocation4], 1

// kernel: tpu_custom_call.1
$region0: #{tpu_custom_call.1}
  #allocation0 [shape = 'u32[]', space=smem, size = 0x4, offset = 0x4, fixed_abs, tag = 'smem constant byte address 0x4 - core index']
  #allocation1 [shape = 'u32[144,128]{1,0:T(1,128)}', space=vmem, size = 0x12000, scoped, tag = 'internal scratch']
  %s0 = inlined_call_operand.vmem [shape: f32[2,16,32], index: 0, kind: input, shape index: {}]
  %s1 = inlined_call_operand.hbm [shape: f32[2,8,32], index: 1, kind: input, shape index: {}]
  %s2 = inlined_call_operand.vmem [shape: f32[2,16], index: 2, kind: input, shape index: {}]
  %s3 = inlined_call_operand.hbm [shape: f32[2,8], index: 3, kind: input, shape index: {}]
  %s4 = inlined_call_operand.vmem [shape: f32[32,64], index: 4, kind: input, shape index: {}]
  %s5 = inlined_call_operand.hbm [shape: f32[1,64], index: 5, kind: input, shape index: {}]
  %s6 = inlined_call_operand.vmem [shape: f32[64,4], index: 6, kind: input, shape index: {}]
  %s7 = inlined_call_operand.hbm [shape: f32[1,4], index: 7, kind: input, shape index: {}]
  %s8 = inlined_call_operand.vmem [shape: f32[32,32], index: 8, kind: input, shape index: {}]
  %s9 = inlined_call_operand.hbm [shape: f32[32,32], index: 9, kind: input, shape index: {}]
  %s10 = inlined_call_operand.vmem [shape: f32[1,32], index: 10, kind: input, shape index: {}]
  %s11 = inlined_call_operand.hbm [shape: f32[32,128], index: 11, kind: input, shape index: {}]
  %s12 = inlined_call_operand.vmem [shape: f32[1,128], index: 12, kind: input, shape index: {}]
  %s13 = inlined_call_operand.hbm [shape: f32[2,128], index: 13, kind: output, shape index: {}]
  %s14 = sld [smem:[#allocation0]]
  $region86: #{tpu_custom_call.1} parent=0
    _
  %s16 = ssub.s32 1, %s14
  %s17 = scalar_select 0, %s16, %s14
  $region1: #{tpu_custom_call.1} parent=0
    #allocation2 [shape = 'u8[8192]{0}', space=vmem, size = 0x2000, scoped, tag = 'input window, operand 1, single buffered']
    #allocation3 [shape = 's32[1]{0}', space=sflag, size = 0x4, scoped, tag = 'scoped memory for tpu_custom_call.1']
    #allocation4 [shape = 's32[1]{0}', space=sflag, size = 0x4, scoped, tag = 'scoped memory for tpu_custom_call.1']
    #allocation5 [shape = 'u8[1024]{0}', space=vmem, size = 0x400, scoped, tag = 'input window, operand 3, single buffered']
    #allocation6 [shape = 's32[1]{0}', space=sflag, size = 0x4, scoped, tag = 'scoped memory for tpu_custom_call.1']
    #allocation7 [shape = 'u8[512]{0}', space=vmem, size = 0x400, scoped, tag = 'input window, operand 5, single buffered']
    #allocation8 [shape = 'u8[512]{0}', space=vmem, size = 0x400, scoped, tag = 'input window, operand 7, single buffered']
    #allocation9 [shape = 's32[1]{0}', space=sflag, size = 0x4, scoped, tag = 'scoped memory for tpu_custom_call.1']
    #allocation10 [shape = 'u8[16384]{0}', space=vmem, size = 0x4000, scoped, tag = 'input window, operand 9, single buffered']
    #allocation11 [shape = 'u8[16384]{0}', space=vmem, size = 0x4000, scoped, tag = 'input window, operand 11, single buffered']
    #allocation12 [shape = 's32[1]{0}', space=sflag, size = 0x4, scoped, tag = 'scoped memory for tpu_custom_call.1']
    #allocation13 [shape = 'u8[1024]{0}', space=vmem, size = 0x400, scoped, tag = 'output window, operand 0, single buffered']
    %18 = vsyncpa [#allocation3], 0
    %19 = vsyncpa [#allocation6], 0
    %20 = vsyncpa [#allocation9], 0
    %21 = vsyncpa [#allocation12], 0
    %22 = vsyncpa [#allocation4], 0
    // Predicated region
    $region2: #{tpu_custom_call.1} parent=1 // pred_check
      _
    $region3: #{tpu_custom_call.1} parent=1 // pred_check_branch
      %24 = sbr.rel (0) target = $region5
    $region4: #{tpu_custom_call.1} parent=1 // pred_region
      _
    $region5: #{tpu_custom_call.1} parent=1 // pred_fallthru
      _
    // Predicated region
    $region6: #{tpu_custom_call.1} parent=1 // pred_check
      _
    $region7: #{tpu_custom_call.1} parent=1 // pred_check_branch
      %26 = sbr.rel (0) target = $region9
    $region8: #{tpu_custom_call.1} parent=1 // pred_region
      %s28 = ssub.s32 256, 256
      %29 = vsyncadd [#allocation3], %s28
      %s30 = sshll.u32 [#allocation2], 4
      %s31 = int_to_ptr.vmem [resolvable:$true] %s30
      %36 = dma.hbm_to_vmem [thread:$0]  %s1, 256, %s31, [#allocation3], 128, 128, 8
    $region9: #{tpu_custom_call.1} parent=1 // pred_fallthru
      _
    // Predicated region
    $region10: #{tpu_custom_call.1} parent=1 // pred_check
      _
    $region11: #{tpu_custom_call.1} parent=1 // pred_check_branch
      %38 = sbr.rel (0) target = $region13
    $region12: #{tpu_custom_call.1} parent=1 // pred_region
      _
    $region13: #{tpu_custom_call.1} parent=1 // pred_fallthru
      _
    // Predicated region
    $region14: #{tpu_custom_call.1} parent=1 // pred_check
      _
    $region15: #{tpu_custom_call.1} parent=1 // pred_check_branch
      %40 = sbr.rel (0) target = $region17
    $region16: #{tpu_custom_call.1} parent=1 // pred_region
      %s42 = ssub.s32 32, 32
      %43 = vsyncadd [#allocation6], %s42
      %s45 = sshll.u32 [#allocation5], 4
      %s46 = int_to_ptr.vmem [resolvable:$true] %s45
      %48 = dma.hbm_to_vmem [thread:$0]  %s3, 32, %s46, [#allocation6]
    $region17: #{tpu_custom_call.1} parent=1 // pred_fallthru
      _
    // Predicated region
    $region18: #{tpu_custom_call.1} parent=1 // pred_check
      _
    $region19: #{tpu_custom_call.1} parent=1 // pred_check_branch
      %50 = sbr.rel (0) target = $region21
    $region20: #{tpu_custom_call.1} parent=1 // pred_region
      _
    $region21: #{tpu_custom_call.1} parent=1 // pred_fallthru
      _
    // Predicated region
    $region22: #{tpu_custom_call.1} parent=1 // pred_check
      _
    $region23: #{tpu_custom_call.1} parent=1 // pred_check_branch
      %52 = sbr.rel (0) target = $region25
    $region24: #{tpu_custom_call.1} parent=1 // pred_region
      %s54 = ssub.s32 16, 16
      %55 = vsyncadd [#allocation6], %s54
      %s57 = sshll.u32 [#allocation7], 4
      %s58 = int_to_ptr.vmem [resolvable:$true] %s57
      %60 = dma.hbm_to_vmem [thread:$0]  %s5, 16, %s58, [#allocation6]
    $region25: #{tpu_custom_call.1} parent=1 // pred_fallthru
      _
    // Predicated region
    $region26: #{tpu_custom_call.1} parent=1 // pred_check
      _
    $region27: #{tpu_custom_call.1} parent=1 // pred_check_branch
      %62 = sbr.rel (0) target = $region29
    $region28: #{tpu_custom_call.1} parent=1 // pred_region
      _
    $region29: #{tpu_custom_call.1} parent=1 // pred_fallthru
      _
    // Predicated region
    $region30: #{tpu_custom_call.1} parent=1 // pred_check
      _
    $region31: #{tpu_custom_call.1} parent=1 // pred_check_branch
      %64 = sbr.rel (0) target = $region33
    $region32: #{tpu_custom_call.1} parent=1 // pred_region
      %s66 = ssub.s32 16, 16
      %67 = vsyncadd [#allocation9], %s66
      %s69 = sshll.u32 [#allocation8], 4
      %s70 = int_to_ptr.vmem [resolvable:$true] %s69
      %72 = dma.hbm_to_vmem [thread:$0]  %s7, 16, %s70, [#allocation9]
    $region33: #{tpu_custom_call.1} parent=1 // pred_fallthru
      _
    // Predicated region
    $region34: #{tpu_custom_call.1} parent=1 // pred_check
      _
    $region35: #{tpu_custom_call.1} parent=1 // pred_check_branch
      %74 = sbr.rel (0) target = $region37
    $region36: #{tpu_custom_call.1} parent=1 // pred_region
      _
    $region37: #{tpu_custom_call.1} parent=1 // pred_fallthru
      _
    // Predicated region
    $region38: #{tpu_custom_call.1} parent=1 // pred_check
      _
    $region39: #{tpu_custom_call.1} parent=1 // pred_check_branch
      %76 = sbr.rel (0) target = $region41
    $region40: #{tpu_custom_call.1} parent=1 // pred_region
      %s78 = ssub.s32 512, 512
      %79 = vsyncadd [#allocation9], %s78
      %s80 = sshll.u32 [#allocation10], 4
      %s81 = int_to_ptr.vmem [resolvable:$true] %s80
      %86 = dma.hbm_to_vmem [thread:$0]  %s9, 512, %s81, [#allocation9], 128, 128, 8
    $region41: #{tpu_custom_call.1} parent=1 // pred_fallthru
      _
    // Predicated region
    $region42: #{tpu_custom_call.1} parent=1 // pred_check
      _
    $region43: #{tpu_custom_call.1} parent=1 // pred_check_branch
      %88 = sbr.rel (0) target = $region45
    $region44: #{tpu_custom_call.1} parent=1 // pred_region
      _
    $region45: #{tpu_custom_call.1} parent=1 // pred_fallthru
      _
    // Predicated region
    $region46: #{tpu_custom_call.1} parent=1 // pred_check
      _
    $region47: #{tpu_custom_call.1} parent=1 // pred_check_branch
      %90 = sbr.rel (0) target = $region49
    $region48: #{tpu_custom_call.1} parent=1 // pred_region
      %s92 = ssub.s32 512, 512
      %93 = vsyncadd [#allocation12], %s92
      %s94 = sshll.u32 [#allocation11], 4
      %s95 = int_to_ptr.vmem [resolvable:$true] %s94
      %100 = dma.hbm_to_vmem [thread:$0]  %s11, 512, %s95, [#allocation12], 128, 128, 8
    $region49: #{tpu_custom_call.1} parent=1 // pred_fallthru
      _
    // Predicated region
    $region50: #{tpu_custom_call.1} parent=1 // pred_check
      _
    $region51: #{tpu_custom_call.1} parent=1 // pred_check_branch
      %102 = sbr.rel (0) target = $region53
    $region52: #{tpu_custom_call.1} parent=1 // pred_region
      _
    $region53: #{tpu_custom_call.1} parent=1 // pred_fallthru
      _
    // Predicated region
    $region54: #{tpu_custom_call.1} parent=1 // pred_check
      _
    $region55: #{tpu_custom_call.1} parent=1 // pred_check_branch
      %104 = sbr.rel (0) target = $region57
    $region56: #{tpu_custom_call.1} parent=1 // pred_region
      %105 = dma.done [#allocation3], 256
    $region57: #{tpu_custom_call.1} parent=1 // pred_fallthru
      _
    // Predicated region
    $region58: #{tpu_custom_call.1} parent=1 // pred_check
      _
    $region59: #{tpu_custom_call.1} parent=1 // pred_check_branch
      %107 = sbr.rel (0) target = $region61
    $region60: #{tpu_custom_call.1} parent=1 // pred_region
      %108 = dma.done [#allocation6], 32
    $region61: #{tpu_custom_call.1} parent=1 // pred_fallthru
      _
    // Predicated region
    $region62: #{tpu_custom_call.1} parent=1 // pred_check
      _
    $region63: #{tpu_custom_call.1} parent=1 // pred_check_branch
      %110 = sbr.rel (0) target = $region65
    $region64: #{tpu_custom_call.1} parent=1 // pred_region
      %111 = dma.done [#allocation6], 16
    $region65: #{tpu_custom_call.1} parent=1 // pred_fallthru
      _
    // Predicated region
    $region66: #{tpu_custom_call.1} parent=1 // pred_check
      _
    $region67: #{tpu_custom_call.1} parent=1 // pred_check_branch
      %113 = sbr.rel (0) target = $region69
    $region68: #{tpu_custom_call.1} parent=1 // pred_region
      %114 = dma.done [#allocation9], 16
    $region69: #{tpu_custom_call.1} parent=1 // pred_fallthru
      _
    // Predicated region
    $region70: #{tpu_custom_call.1} parent=1 // pred_check
      _
    $region71: #{tpu_custom_call.1} parent=1 // pred_check_branch
      %116 = sbr.rel (0) target = $region73
    $region72: #{tpu_custom_call.1} parent=1 // pred_region
      %117 = dma.done [#allocation9], 512
    $region73: #{tpu_custom_call.1} parent=1 // pred_fallthru
      _
    // Predicated region
    $region74: #{tpu_custom_call.1} parent=1 // pred_check
      _
    $region75: #{tpu_custom_call.1} parent=1 // pred_check_branch
      %119 = sbr.rel (0) target = $region77
    $region76: #{tpu_custom_call.1} parent=1 // pred_region
      %120 = dma.done [#allocation12], 512
    $region77: #{tpu_custom_call.1} parent=1 // pred_fallthru
      _
    %v121 = vld [vmem:[%s0] sm:$0xff]
    %v122 = vld [vmem:[%s0 + $0x8] sm:$0xff]
    %v123 = vld [vmem:[%s0 + $0x10] sm:$0xff]
    %v124 = vld [vmem:[%s0 + $0x18] sm:$0xff]
    %v125 = vld [vmem:[#allocation2] sm:$0xff]
    %v126 = vld [vmem:[#allocation2 + $0x8] sm:$0xff]
    %v127 = vld [vmem:[%s4] sm:$0xff]
    %v128 = vld [vmem:[%s4 + $0x8] sm:$0xff]
    %v129 = vld [vmem:[%s4 + $0x10] sm:$0xff]
    %v130 = vld [vmem:[%s4 + $0x18] sm:$0xff]
    %v131 = vld [vmem:[#allocation7] sm:$0x1]
    %v133 = vlaneseq
    %v134 = vshrl.u32 %v133, 7
    %v135 = vsub.s32 0, %v134
    %v136 = vrot.slane %v131, %v135
    %vm138 = vcmask 261120
    %v140 = vsel %vm138, %v121, 0
    %v143 = vsel %vm138, %v122, 0
    %v146 = vsel %vm138, %v123, 0
    %v149 = vsel %vm138, %v124, 0
    %v152 = vsel %vm138, %v125, 0
    %v155 = vsel %vm138, %v126, 0
    %157 = vmatprep.subr.mxu0 0.0
    %158 = vmatpush1.msra.mxu0 %v127
    %159 = vmatprep.subr.mxu0 0.0
    %160 = vmatpush1.msra.mxu0 %v128
    %161 = vmatprep.subr.mxu0 0.0
    %162 = vmatpush1.msra.mxu0 %v129
    %163 = vmatprep.subr.mxu0 0.0
    %164 = vmatpush1.msra.mxu0 %v130
    %165 = vmatprep.subr.mxu0 0.0
    %166 = vmatpush1.msra.mxu0 0.0
    %167 = vmatprep.subr.mxu0 0.0
    %168 = vmatpush1.msra.mxu0 0.0
    %169 = vmatprep.subr.mxu0 0.0
    %170 = vmatpush1.msra.mxu0 0.0
    %171 = vmatprep.subr.mxu0 0.0
    %172 = vmatpush1.msra.mxu0 0.0
    %173 = vmatprep.subr.mxu0 0.0
    %174 = vmatpush1.msra.mxu0 0.0
    %175 = vmatprep.subr.mxu0 0.0
    %176 = vmatpush1.msra.mxu0 0.0
    %177 = vmatprep.subr.mxu0 0.0
    %178 = vmatpush1.msra.mxu0 0.0
    %179 = vmatprep.subr.mxu0 0.0
    %180 = vmatpush1.msra.mxu0 0.0
    %181 = vmatprep.subr.mxu0 0.0
    %182 = vmatpush1.msra.mxu0 0.0
    %183 = vmatprep.subr.mxu0 0.0
    %184 = vmatpush1.msra.mxu0 0.0
    %185 = vmatprep.subr.mxu0 0.0
    %186 = vmatpush1.msra.mxu0 0.0
    %187 = vmatprep.subr.mxu0 0.0
    %188 = vmatpush1.msra.mxu0 0.0
    %189 = vmatprep.subr.mxu0 0.0
    %190 = vmatpush1.msra.mxu0 0.0
    %191 = vmatprep.subr.mxu0 0.0
    %192 = vmatpush1.msra.mxu0 0.0
    %193 = vmatprep.subr.mxu0 0.0
    %194 = vmatpush1.msra.mxu0 0.0
    %195 = vmatprep.subr.mxu0 0.0
    %196 = vmatpush1.msra.mxu0 0.0
    %197 = vmatprep.subr.mxu0 0.0
    %198 = vmatpush1.msra.mxu0 0.0
    %199 = vmatprep.subr.mxu0 0.0
    %200 = vmatpush1.msra.mxu0 0.0
    %201 = vmatprep.subr.mxu0 0.0
    %202 = vmatpush1.msra.mxu0 0.0
    %203 = vmatprep.subr.mxu0 0.0
    %204 = vmatpush1.msra.mxu0 0.0
    %205 = vmatprep.subr.mxu0 0.0
    %206 = vmatpush1.msra.mxu0 0.0
    %207 = vmatprep.subr.mxu0 0.0
    %208 = vmatpush1.msra.mxu0 0.0
    %209 = vmatprep.subr.mxu0 0.0
    %210 = vmatpush1.msra.mxu0 0.0
    %211 = vmatprep.subr.mxu0 0.0
    %212 = vmatpush1.msra.mxu0 0.0
    %213 = vmatprep.subr.mxu0 0.0
    %214 = vmatpush1.msra.mxu0 0.0
    %215 = vmatprep.subr.mxu0 0.0
    %216 = vmatpush1.msra.mxu0 0.0
    %217 = vmatprep.subr.mxu0 0.0
    %218 = vmatpush1.msra.mxu0 0.0
    %219 = vmatprep.subr.mxu0 0.0
    %220 = vmatpush1.msra.mxu0 0.0
    %221 = vmatprep.mubr.f32.mxu0 0.0
    %222 = vmatmul.mubr.f32.gmra.mrb[0].mxu0 %v140
    %v223 = vpop.f32.mrb[0].mxu0
    %v224 = vadd.f32 %v136, %v223
    %v225 = vpop.f32.mrb[0].mxu0
    %226 = vmatprep.mubr.f32.mxu0 0.0
    %227 = vmatmul.mubr.f32.gmra.mrb[0].mxu0 %v143
    %v228 = vpop.f32.mrb[0].mxu0
    %v229 = vadd.f32 %v136, %v228
    %v230 = vpop.f32.mrb[0].mxu0
    %231 = vmatprep.mubr.f32.mxu0 0.0
    %232 = vmatmul.mubr.f32.gmra.mrb[0].mxu0 %v146
    %v233 = vpop.f32.mrb[0].mxu0
    %v234 = vadd.f32 %v136, %v233
    %v235 = vpop.f32.mrb[0].mxu0
    %236 = vmatprep.mubr.f32.mxu0 0.0
    %237 = vmatmul.mubr.f32.gmra.mrb[0].mxu0 %v149
    %v238 = vpop.f32.mrb[0].mxu0
    %v239 = vadd.f32 %v136, %v238
    %v240 = vpop.f32.mrb[0].mxu0
    %241 = vmatprep.mubr.f32.mxu0 0.0
    %242 = vmatmul.mubr.f32.gmra.mrb[0].mxu0 %v152
    %v243 = vpop.f32.mrb[0].mxu0
    %v244 = vadd.f32 %v136, %v243
    %v245 = vpop.f32.mrb[0].mxu0
    %246 = vmatprep.mubr.f32.mxu0 0.0
    %247 = vmatmul.mubr.f32.gmra.mrb[0].mxu0 %v155
    %v248 = vpop.f32.mrb[0].mxu0
    %v249 = vadd.f32 %v136, %v248
    %v250 = vpop.f32.mrb[0].mxu0
    %251 = vdwg.mxu0
    %v252 = vmax.f32 %v224, 0.0
    %v253 = vmax.f32 %v229, 0.0
    %v254 = vmax.f32 %v234, 0.0
    %v255 = vmax.f32 %v239, 0.0
    %v256 = vmax.f32 %v244, 0.0
    %v257 = vmax.f32 %v249, 0.0
    %v258 = vld [vmem:[%s6] sm:$0xff]
    %v259 = vld [vmem:[%s6 + $0x8] sm:$0xff]
    %v260 = vld [vmem:[%s6 + $0x10] sm:$0xff]
    %v261 = vld [vmem:[%s6 + $0x18] sm:$0xff]
    %v262 = vld [vmem:[%s6 + $0x20] sm:$0xff]
    %v263 = vld [vmem:[%s6 + $0x28] sm:$0xff]
    %v264 = vld [vmem:[%s6 + $0x30] sm:$0xff]
    %v265 = vld [vmem:[%s6 + $0x38] sm:$0xff]
    %v266 = vld [vmem:[#allocation8] sm:$0x1]
    %v268 = vlaneseq
    %v269 = vshrl.u32 %v268, 7
    %v270 = vsub.s32 0, %v269
    %v271 = vrot.slane %v266, %v270
    %vm273 = vcmask 523264
    %v275 = vsel %vm273, %v252, 0
    %v278 = vsel %vm273, %v253, 0
    %v281 = vsel %vm273, %v254, 0
    %v284 = vsel %vm273, %v255, 0
    %v287 = vsel %vm273, %v256, 0
    %v290 = vsel %vm273, %v257, 0
    %292 = vmatprep.subr.mxu0 0.0
    %293 = vmatpush1.msra.mxu0 %v258
    %294 = vmatprep.subr.mxu0 0.0
    %295 = vmatpush1.msra.mxu0 %v259
    %296 = vmatprep.subr.mxu0 0.0
    %297 = vmatpush1.msra.mxu0 %v260
    %298 = vmatprep.subr.mxu0 0.0
    %299 = vmatpush1.msra.mxu0 %v261
    %300 = vmatprep.subr.mxu0 0.0
    %301 = vmatpush1.msra.mxu0 %v262
    %302 = vmatprep.subr.mxu0 0.0
    %303 = vmatpush1.msra.mxu0 %v263
    %304 = vmatprep.subr.mxu0 0.0
    %305 = vmatpush1.msra.mxu0 %v264
    %306 = vmatprep.subr.mxu0 0.0
    %307 = vmatpush1.msra.mxu0 %v265
    %308 = vmatprep.subr.mxu0 0.0
    %309 = vmatpush1.msra.mxu0 0.0
    %310 = vmatprep.subr.mxu0 0.0
    %311 = vmatpush1.msra.mxu0 0.0
    %312 = vmatprep.subr.mxu0 0.0
    %313 = vmatpush1.msra.mxu0 0.0
    %314 = vmatprep.subr.mxu0 0.0
    %315 = vmatpush1.msra.mxu0 0.0
    %316 = vmatprep.subr.mxu0 0.0
    %317 = vmatpush1.msra.mxu0 0.0
    %318 = vmatprep.subr.mxu0 0.0
    %319 = vmatpush1.msra.mxu0 0.0
    %320 = vmatprep.subr.mxu0 0.0
    %321 = vmatpush1.msra.mxu0 0.0
    %322 = vmatprep.subr.mxu0 0.0
    %323 = vmatpush1.msra.mxu0 0.0
    %324 = vmatprep.subr.mxu0 0.0
    %325 = vmatpush1.msra.mxu0 0.0
    %326 = vmatprep.subr.mxu0 0.0
    %327 = vmatpush1.msra.mxu0 0.0
    %328 = vmatprep.subr.mxu0 0.0
    %329 = vmatpush1.msra.mxu0 0.0
    %330 = vmatprep.subr.mxu0 0.0
    %331 = vmatpush1.msra.mxu0 0.0
    %332 = vmatprep.subr.mxu0 0.0
    %333 = vmatpush1.msra.mxu0 0.0
    %334 = vmatprep.subr.mxu0 0.0
    %335 = vmatpush1.msra.mxu0 0.0
    %336 = vmatprep.subr.mxu0 0.0
    %337 = vmatpush1.msra.mxu0 0.0
    %338 = vmatprep.subr.mxu0 0.0
    %339 = vmatpush1.msra.mxu0 0.0
    %340 = vmatprep.subr.mxu0 0.0
    %341 = vmatpush1.msra.mxu0 0.0
    %342 = vmatprep.subr.mxu0 0.0
    %343 = vmatpush1.msra.mxu0 0.0
    %344 = vmatprep.subr.mxu0 0.0
    %345 = vmatpush1.msra.mxu0 0.0
    %346 = vmatprep.subr.mxu0 0.0
    %347 = vmatpush1.msra.mxu0 0.0
    %348 = vmatprep.subr.mxu0 0.0
    %349 = vmatpush1.msra.mxu0 0.0
    %350 = vmatprep.subr.mxu0 0.0
    %351 = vmatpush1.msra.mxu0 0.0
    %352 = vmatprep.subr.mxu0 0.0
    %353 = vmatpush1.msra.mxu0 0.0
    %354 = vmatprep.subr.mxu0 0.0
    %355 = vmatpush1.msra.mxu0 0.0
    %356 = vmatprep.mubr.f32.mxu0 0.0
    %357 = vmatmul.mubr.f32.gmra.mrb[0].mxu0 %v275
    %v358 = vpop.f32.mrb[0].mxu0
    %v359 = vadd.f32 %v271, %v358
    %v360 = vpop.f32.mrb[0].mxu0
    %361 = vmatprep.mubr.f32.mxu0 0.0
    %362 = vmatmul.mubr.f32.gmra.mrb[0].mxu0 %v278
    %v363 = vpop.f32.mrb[0].mxu0
    %v364 = vadd.f32 %v271, %v363
    %v365 = vpop.f32.mrb[0].mxu0
    %366 = vmatprep.mubr.f32.mxu0 0.0
    %367 = vmatmul.mubr.f32.gmra.mrb[0].mxu0 %v281
    %v368 = vpop.f32.mrb[0].mxu0
    %v369 = vadd.f32 %v271, %v368
    %v370 = vpop.f32.mrb[0].mxu0
    %371 = vmatprep.mubr.f32.mxu0 0.0
    %372 = vmatmul.mubr.f32.gmra.mrb[0].mxu0 %v284
    %v373 = vpop.f32.mrb[0].mxu0
    %v374 = vadd.f32 %v271, %v373
    %v375 = vpop.f32.mrb[0].mxu0
    %376 = vmatprep.mubr.f32.mxu0 0.0
    %377 = vmatmul.mubr.f32.gmra.mrb[0].mxu0 %v287
    %v378 = vpop.f32.mrb[0].mxu0
    %v379 = vadd.f32 %v271, %v378
    %v380 = vpop.f32.mrb[0].mxu0
    %381 = vmatprep.mubr.f32.mxu0 0.0
    %382 = vmatmul.mubr.f32.gmra.mrb[0].mxu0 %v290
    %v383 = vpop.f32.mrb[0].mxu0
    %v384 = vadd.f32 %v271, %v383
    %v385 = vpop.f32.mrb[0].mxu0
    %386 = vdwg.mxu0
    %v387 = vld [vmem:[%s2] sm:$0x3]
    %v388 = vlaneseq
    %v389 = vshrl.u32 %v388, 7
    %v390 = vsub.s32 0, %v389
    %v391 = vrot.slane %v387, %v390
    %393 = vbcast.lane.b32.xlu0 %v391, 256
    %v394 = vpop.permute.xlu0 %393
    %s396 = sor.u32 256, 8
    %397 = vbcast.lane.b32.xlu0 %v391, %s396
    %v398 = vpop.permute.xlu0 %397
    %v399 = vlaneseq
    %v400 = vshrl.u32 %v399, 7
    %v401 = vsub.s32 1, %v400
    %v402 = vrot.slane %v387, %v401
    %404 = vbcast.lane.b32.xlu0 %v402, 256
    %v405 = vpop.permute.xlu0 %404
    %s407 = sor.u32 256, 8
    %408 = vbcast.lane.b32.xlu0 %v402, %s407
    %v409 = vpop.permute.xlu0 %408
    %v410 = vadd.f32 %v359, %v394
    %v411 = vadd.f32 %v364, %v398
    %v412 = vadd.f32 %v369, %v405
    %v413 = vadd.f32 %v374, %v409
    %vm414 = vcmask 15360
    %v415 = vsel %vm414, %v410, -inf
    %v416 = vsel %vm414, %v411, -inf
    %v417 = vmax.f32 %v415, %v416
    %v418 = vrot.slane %v417, 4
    %v419 = vmax.f32 %v417, %v418
    %v420 = vrot.slane %v419, 2
    %v421 = vmax.f32 %v419, %v420
    %v422 = vrot.slane %v421, 1
    %v423 = vmax.f32 %v421, %v422
    %v424 = vsel %vm414, %v412, -inf
    %v425 = vsel %vm414, %v413, -inf
    %v426 = vmax.f32 %v424, %v425
    %v427 = vrot.slane %v426, 4
    %v428 = vmax.f32 %v426, %v427
    %v429 = vrot.slane %v428, 2
    %v430 = vmax.f32 %v428, %v429
    %v431 = vrot.slane %v430, 1
    %v432 = vmax.f32 %v430, %v431
    %v433 = vsub.f32 %v410, %v423
    %v434 = vsub.f32 %v411, %v423
    %v435 = vsub.f32 %v412, %v432
    %v436 = vsub.f32 %v413, %v432
    %v437 = vmul.f32 %v433, 1.442695
    %v438 = vpow.pop %v437
    %v439 = vmul.f32 %v434, 1.442695
    %v440 = vpow.pop %v439
    %v441 = vmul.f32 %v435, 1.442695
    %v442 = vpow.pop %v441
    %v443 = vmul.f32 %v436, 1.442695
    %v444 = vpow.pop %v443
    %v445 = vsel %vm414, %v438, 0.0
    %v446 = vsel %vm414, %v440, 0.0
    %v447 = vadd.f32 %v445, %v446
    %v448 = vrot.slane %v447, 4
    %v449 = vadd.f32 %v447, %v448
    %v450 = vrot.slane %v449, 2
    %v451 = vadd.f32 %v449, %v450
    %v452 = vrot.slane %v451, 1
    %v453 = vadd.f32 %v451, %v452
    %v454 = vsel %vm414, %v442, 0.0
    %v455 = vsel %vm414, %v444, 0.0
    %v456 = vadd.f32 %v454, %v455
    %v457 = vrot.slane %v456, 4
    %v458 = vadd.f32 %v456, %v457
    %v459 = vrot.slane %v458, 2
    %v460 = vadd.f32 %v458, %v459
    %v461 = vrot.slane %v460, 1
    %v462 = vadd.f32 %v460, %v461
    %v463 = vrcp.pop %v453
    %v464 = vrcp.pop %v462
    %v465 = vmul.f32 %v438, %v463
    %v466 = vmul.f32 %v440, %v463
    %v467 = vmul.f32 %v442, %v464
    %v468 = vmul.f32 %v444, %v464
    %v469 = vsel %vm414, %v465, 0.0
    %470 = vadd.xlane.f32.xlu0 %v469
    %v471 = vpop.xlane.xlu0 %470
    %v472 = vsel %vm414, %v466, 0.0
    %473 = vadd.xlane.f32.xlu0 %v472
    %v474 = vpop.xlane.xlu0 %473
    %v475 = vsel %vm414, %v467, 0.0
    %476 = vadd.xlane.f32.xlu0 %v475
    %v477 = vpop.xlane.xlu0 %476
    %v478 = vsel %vm414, %v468, 0.0
    %479 = vadd.xlane.f32.xlu0 %v478
    %v480 = vpop.xlane.xlu0 %479
    %v481 = vrcp.pop 2.0
    %v482 = vmul.f32 %v471, %v481
    %v483 = vmul.f32 %v474, %v481
    %v484 = vmul.f32 %v477, %v481
    %v485 = vmul.f32 %v480, %v481
    %v486 = vmul.f32 %v482, %v121
    %v487 = vmul.f32 %v483, %v122
    %v488 = vmul.f32 %v484, %v123
    %v489 = vmul.f32 %v485, %v124
    %v490 = vsel %vm138, %v486, 0.0
    %v491 = vsel %vm138, %v487, 0.0
    %v492 = vadd.f32 %v490, %v491
    %v493 = vrot.slane %v492, 4
    %v494 = vadd.f32 %v492, %v493
    %v495 = vrot.slane %v494, 2
    %v496 = vadd.f32 %v494, %v495
    %v497 = vrot.slane %v496, 1
    %v498 = vadd.f32 %v496, %v497
    %v499 = vsel %vm138, %v488, 0.0
    %v500 = vsel %vm138, %v489, 0.0
    %v501 = vadd.f32 %v499, %v500
    %v502 = vrot.slane %v501, 4
    %v503 = vadd.f32 %v501, %v502
    %v504 = vrot.slane %v503, 2
    %v505 = vadd.f32 %v503, %v504
    %v506 = vrot.slane %v505, 1
    %v507 = vadd.f32 %v505, %v506
    %v508 = vld [vmem:[#allocation5] sm:$0x3]
    %v509 = vlaneseq
    %v510 = vshrl.u32 %v509, 7
    %v511 = vsub.s32 0, %v510
    %v512 = vrot.slane %v508, %v511
    %514 = vbcast.lane.b32.xlu0 %v512, 256
    %v515 = vpop.permute.xlu0 %514
    %v516 = vlaneseq
    %v517 = vshrl.u32 %v516, 7
    %v518 = vsub.s32 1, %v517
    %v519 = vrot.slane %v508, %v518
    %521 = vbcast.lane.b32.xlu0 %v519, 256
    %v522 = vpop.permute.xlu0 %521
    %v523 = vadd.f32 %v379, %v515
    %v524 = vadd.f32 %v384, %v522
    %vm525 = vcmask 31760
    %v526 = vsel %vm525, %v523, -inf
    %v527 = vrot.slane %v526, 4
    %v528 = vmax.f32 %v526, %v527
    %v529 = vrot.slane %v528, 2
    %v530 = vmax.f32 %v528, %v529
    %v531 = vrot.slane %v530, 1
    %v532 = vmax.f32 %v530, %v531
    %v533 = vsel %vm525, %v524, -inf
    %v534 = vrot.slane %v533, 4
    %v535 = vmax.f32 %v533, %v534
    %v536 = vrot.slane %v535, 2
    %v537 = vmax.f32 %v535, %v536
    %v538 = vrot.slane %v537, 1
    %v539 = vmax.f32 %v537, %v538
    %v540 = vsub.f32 %v523, %v532
    %v541 = vsub.f32 %v524, %v539
    %v542 = vmul.f32 %v540, 1.442695
    %v543 = vpow.pop %v542
    %v544 = vmul.f32 %v541, 1.442695
    %v545 = vpow.pop %v544
    %v546 = vsel %vm525, %v543, 0.0
    %v547 = vrot.slane %v546, 4
    %v548 = vadd.f32 %v546, %v547
    %v549 = vrot.slane %v548, 2
    %v550 = vadd.f32 %v548, %v549
    %v551 = vrot.slane %v550, 1
    %v552 = vadd.f32 %v550, %v551
    %v553 = vsel %vm525, %v545, 0.0
    %v554 = vrot.slane %v553, 4
    %v555 = vadd.f32 %v553, %v554
    %v556 = vrot.slane %v555, 2
    %v557 = vadd.f32 %v555, %v556
    %v558 = vrot.slane %v557, 1
    %v559 = vadd.f32 %v557, %v558
    %v560 = vrcp.pop %v552
    %v561 = vrcp.pop %v559
    %v562 = vmul.f32 %v543, %v560
    %v563 = vmul.f32 %v545, %v561
    %566 = vrot.lane.b32.xlu0 %v562, 126
    %v567 = vpop.permute.xlu0 %566
    %568 = vrot.lane.b32.xlu0 %v563, 126
    %v569 = vpop.permute.xlu0 %568
    %v572 = vsel %vm414, %v567, 0.0
    %573 = vadd.xlane.f32.xlu0 %v572
    %v574 = vpop.xlane.xlu0 %573
    %v575 = vsel %vm414, %v569, 0.0
    %576 = vadd.xlane.f32.xlu0 %v575
    %v577 = vpop.xlane.xlu0 %576
    %v578 = vmul.f32 %v574, %v481
    %v579 = vmul.f32 %v577, %v481
    %v580 = vmul.f32 %v578, %v125
    %v581 = vmul.f32 %v579, %v126
    %v582 = vsel %vm138, %v580, 0.0
    %v583 = vrot.slane %v582, 4
    %v584 = vadd.f32 %v582, %v583
    %v585 = vrot.slane %v584, 2
    %v586 = vadd.f32 %v584, %v585
    %v587 = vrot.slane %v586, 1
    %v588 = vadd.f32 %v586, %v587
    %v589 = vsel %vm138, %v581, 0.0
    %v590 = vrot.slane %v589, 4
    %v591 = vadd.f32 %v589, %v590
    %v592 = vrot.slane %v591, 2
    %v593 = vadd.f32 %v591, %v592
    %v594 = vrot.slane %v593, 1
    %v595 = vadd.f32 %v593, %v594
    %v596 = vld [vmem:[%s8] sm:$0xff]
    %v597 = vld [vmem:[%s8 + $0x8] sm:$0xff]
    %v598 = vld [vmem:[%s8 + $0x10] sm:$0xff]
    %v599 = vld [vmem:[%s8 + $0x18] sm:$0xff]
    %v600 = vld [vmem:[#allocation10] sm:$0xff]
    %v601 = vld [vmem:[#allocation10 + $0x8] sm:$0xff]
    %v602 = vld [vmem:[#allocation10 + $0x10] sm:$0xff]
    %v603 = vld [vmem:[#allocation10 + $0x18] sm:$0xff]
    %vm606 = vcmask 1041409
    %v607 = vsel %vm606, %v595, %v588
    %v608 = vsel %vm138, %v607, 0
    %610 = vmatprep.subr.mxu0 0.0
    %611 = vmatpush1.msra.mxu0 %v600
    %612 = vmatprep.subr.mxu0 0.0
    %613 = vmatpush1.msra.mxu0 %v601
    %614 = vmatprep.subr.mxu0 0.0
    %615 = vmatpush1.msra.mxu0 %v602
    %616 = vmatprep.subr.mxu0 0.0
    %617 = vmatpush1.msra.mxu0 %v603
    %618 = vmatprep.subr.mxu0 0.0
    %619 = vmatpush1.msra.mxu0 0.0
    %620 = vmatprep.subr.mxu0 0.0
    %621 = vmatpush1.msra.mxu0 0.0
    %622 = vmatprep.subr.mxu0 0.0
    %623 = vmatpush1.msra.mxu0 0.0
    %624 = vmatprep.subr.mxu0 0.0
    %625 = vmatpush1.msra.mxu0 0.0
    %626 = vmatprep.subr.mxu0 0.0
    %627 = vmatpush1.msra.mxu0 0.0
    %628 = vmatprep.subr.mxu0 0.0
    %629 = vmatpush1.msra.mxu0 0.0
    %630 = vmatprep.subr.mxu0 0.0
    %631 = vmatpush1.msra.mxu0 0.0
    %632 = vmatprep.subr.mxu0 0.0
    %633 = vmatpush1.msra.mxu0 0.0
    %634 = vmatprep.subr.mxu0 0.0
    %635 = vmatpush1.msra.mxu0 0.0
    %636 = vmatprep.subr.mxu0 0.0
    %637 = vmatpush1.msra.mxu0 0.0
    %638 = vmatprep.subr.mxu0 0.0
    %639 = vmatpush1.msra.mxu0 0.0
    %640 = vmatprep.subr.mxu0 0.0
    %641 = vmatpush1.msra.mxu0 0.0
    %642 = vmatprep.subr.mxu0 0.0
    %643 = vmatpush1.msra.mxu0 0.0
    %644 = vmatprep.subr.mxu0 0.0
    %645 = vmatpush1.msra.mxu0 0.0
    %646 = vmatprep.subr.mxu0 0.0
    %647 = vmatpush1.msra.mxu0 0.0
    %648 = vmatprep.subr.mxu0 0.0
    %649 = vmatpush1.msra.mxu0 0.0
    %650 = vmatprep.subr.mxu0 0.0
    %651 = vmatpush1.msra.mxu0 0.0
    %652 = vmatprep.subr.mxu0 0.0
    %653 = vmatpush1.msra.mxu0 0.0
    %654 = vmatprep.subr.mxu0 0.0
    %655 = vmatpush1.msra.mxu0 0.0
    %656 = vmatprep.subr.mxu0 0.0
    %657 = vmatpush1.msra.mxu0 0.0
    %658 = vmatprep.subr.mxu0 0.0
    %659 = vmatpush1.msra.mxu0 0.0
    %660 = vmatprep.subr.mxu0 0.0
    %661 = vmatpush1.msra.mxu0 0.0
    %662 = vmatprep.subr.mxu0 0.0
    %663 = vmatpush1.msra.mxu0 0.0
    %664 = vmatprep.subr.mxu0 0.0
    %665 = vmatpush1.msra.mxu0 0.0
    %666 = vmatprep.subr.mxu0 0.0
    %667 = vmatpush1.msra.mxu0 0.0
    %668 = vmatprep.subr.mxu0 0.0
    %669 = vmatpush1.msra.mxu0 0.0
    %670 = vmatprep.subr.mxu0 0.0
    %671 = vmatpush1.msra.mxu0 0.0
    %672 = vmatprep.subr.mxu0 0.0
    %673 = vmatpush1.msra.mxu0 0.0
    %674 = vmatprep.mubr.f32.mxu0 0.0
    %675 = vmatmul.mubr.f32.gmra.mrb[0].mxu0 %v608
    %v676 = vpop.f32.mrb[0].mxu0
    %v677 = vadd.f32 0.0, %v676
    %v678 = vpop.f32.mrb[0].mxu0
    %679 = vdwg.mxu0
    %v682 = vsel %vm606, %v507, %v498
    %v683 = vsel %vm138, %v682, 0
    %685 = vmatprep.subr.mxu0 0.0
    %686 = vmatpush1.msra.mxu0 %v596
    %687 = vmatprep.subr.mxu0 0.0
    %688 = vmatpush1.msra.mxu0 %v597
    %689 = vmatprep.subr.mxu0 0.0
    %690 = vmatpush1.msra.mxu0 %v598
    %691 = vmatprep.subr.mxu0 0.0
    %692 = vmatpush1.msra.mxu0 %v599
    %693 = vmatprep.subr.mxu0 0.0
    %694 = vmatpush1.msra.mxu0 0.0
    %695 = vmatprep.subr.mxu0 0.0
    %696 = vmatpush1.msra.mxu0 0.0
    %697 = vmatprep.subr.mxu0 0.0
    %698 = vmatpush1.msra.mxu0 0.0
    %699 = vmatprep.subr.mxu0 0.0
    %700 = vmatpush1.msra.mxu0 0.0
    %701 = vmatprep.subr.mxu0 0.0
    %702 = vmatpush1.msra.mxu0 0.0
    %703 = vmatprep.subr.mxu0 0.0
    %704 = vmatpush1.msra.mxu0 0.0
    %705 = vmatprep.subr.mxu0 0.0
    %706 = vmatpush1.msra.mxu0 0.0
    %707 = vmatprep.subr.mxu0 0.0
    %708 = vmatpush1.msra.mxu0 0.0
    %709 = vmatprep.subr.mxu0 0.0
    %710 = vmatpush1.msra.mxu0 0.0
    %711 = vmatprep.subr.mxu0 0.0
    %712 = vmatpush1.msra.mxu0 0.0
    %713 = vmatprep.subr.mxu0 0.0
    %714 = vmatpush1.msra.mxu0 0.0
    %715 = vmatprep.subr.mxu0 0.0
    %716 = vmatpush1.msra.mxu0 0.0
    %717 = vmatprep.subr.mxu0 0.0
    %718 = vmatpush1.msra.mxu0 0.0
    %719 = vmatprep.subr.mxu0 0.0
    %720 = vmatpush1.msra.mxu0 0.0
    %721 = vmatprep.subr.mxu0 0.0
    %722 = vmatpush1.msra.mxu0 0.0
    %723 = vmatprep.subr.mxu0 0.0
    %724 = vmatpush1.msra.mxu0 0.0
    %725 = vmatprep.subr.mxu0 0.0
    %726 = vmatpush1.msra.mxu0 0.0
    %727 = vmatprep.subr.mxu0 0.0
    %728 = vmatpush1.msra.mxu0 0.0
    %729 = vmatprep.subr.mxu0 0.0
    %730 = vmatpush1.msra.mxu0 0.0
    %731 = vmatprep.subr.mxu0 0.0
    %732 = vmatpush1.msra.mxu0 0.0
    %733 = vmatprep.subr.mxu0 0.0
    %734 = vmatpush1.msra.mxu0 0.0
    %735 = vmatprep.subr.mxu0 0.0
    %736 = vmatpush1.msra.mxu0 0.0
    %737 = vmatprep.subr.mxu0 0.0
    %738 = vmatpush1.msra.mxu0 0.0
    %739 = vmatprep.subr.mxu0 0.0
    %740 = vmatpush1.msra.mxu0 0.0
    %741 = vmatprep.subr.mxu0 0.0
    %742 = vmatpush1.msra.mxu0 0.0
    %743 = vmatprep.subr.mxu0 0.0
    %744 = vmatpush1.msra.mxu0 0.0
    %745 = vmatprep.subr.mxu0 0.0
    %746 = vmatpush1.msra.mxu0 0.0
    %747 = vmatprep.subr.mxu0 0.0
    %748 = vmatpush1.msra.mxu0 0.0
    %749 = vmatprep.mubr.f32.mxu0 0.0
    %750 = vmatmul.mubr.f32.gmra.mrb[0].mxu0 %v683
    %v751 = vpop.f32.mrb[0].mxu0
    %v752 = vadd.f32 %v677, %v751
    %v753 = vpop.f32.mrb[0].mxu0
    %754 = vdwg.mxu0
    %v755 = vld [vmem:[%s10] sm:$0x1]
    %v757 = vlaneseq
    %v758 = vshrl.u32 %v757, 7
    %v759 = vsub.s32 0, %v758
    %v760 = vrot.slane %v755, %v759
    %v762 = vadd.f32 %v752, %v760
    %v763 = vmax.f32 %v762, 0.0
    %v764 = vld [vmem:[#allocation11] sm:$0xff]
    %v765 = vld [vmem:[#allocation11 + $0x8] sm:$0xff]
    %v766 = vld [vmem:[#allocation11 + $0x10] sm:$0xff]
    %v767 = vld [vmem:[#allocation11 + $0x18] sm:$0xff]
    %v768 = vld [vmem:[%s12] sm:$0x1]
    %v770 = vlaneseq
    %v771 = vshrl.u32 %v770, 7
    %v772 = vsub.s32 0, %v771
    %v773 = vrot.slane %v768, %v772
    %v776 = vsel %vm138, %v763, 0
    %778 = vmatprep.subr.mxu0 0.0
    %779 = vmatpush1.msra.mxu0 %v764
    %780 = vmatprep.subr.mxu0 0.0
    %781 = vmatpush1.msra.mxu0 %v765
    %782 = vmatprep.subr.mxu0 0.0
    %783 = vmatpush1.msra.mxu0 %v766
    %784 = vmatprep.subr.mxu0 0.0
    %785 = vmatpush1.msra.mxu0 %v767
    %786 = vmatprep.subr.mxu0 0.0
    %787 = vmatpush1.msra.mxu0 0.0
    %788 = vmatprep.subr.mxu0 0.0
    %789 = vmatpush1.msra.mxu0 0.0
    %790 = vmatprep.subr.mxu0 0.0
    %791 = vmatpush1.msra.mxu0 0.0
    %792 = vmatprep.subr.mxu0 0.0
    %793 = vmatpush1.msra.mxu0 0.0
    %794 = vmatprep.subr.mxu0 0.0
    %795 = vmatpush1.msra.mxu0 0.0
    %796 = vmatprep.subr.mxu0 0.0
    %797 = vmatpush1.msra.mxu0 0.0
    %798 = vmatprep.subr.mxu0 0.0
    %799 = vmatpush1.msra.mxu0 0.0
    %800 = vmatprep.subr.mxu0 0.0
    %801 = vmatpush1.msra.mxu0 0.0
    %802 = vmatprep.subr.mxu0 0.0
    %803 = vmatpush1.msra.mxu0 0.0
    %804 = vmatprep.subr.mxu0 0.0
    %805 = vmatpush1.msra.mxu0 0.0
    %806 = vmatprep.subr.mxu0 0.0
    %807 = vmatpush1.msra.mxu0 0.0
    %808 = vmatprep.subr.mxu0 0.0
    %809 = vmatpush1.msra.mxu0 0.0
    %810 = vmatprep.subr.mxu0 0.0
    %811 = vmatpush1.msra.mxu0 0.0
    %812 = vmatprep.subr.mxu0 0.0
    %813 = vmatpush1.msra.mxu0 0.0
    %814 = vmatprep.subr.mxu0 0.0
    %815 = vmatpush1.msra.mxu0 0.0
    %816 = vmatprep.subr.mxu0 0.0
    %817 = vmatpush1.msra.mxu0 0.0
    %818 = vmatprep.subr.mxu0 0.0
    %819 = vmatpush1.msra.mxu0 0.0
    %820 = vmatprep.subr.mxu0 0.0
    %821 = vmatpush1.msra.mxu0 0.0
    %822 = vmatprep.subr.mxu0 0.0
    %823 = vmatpush1.msra.mxu0 0.0
    %824 = vmatprep.subr.mxu0 0.0
    %825 = vmatpush1.msra.mxu0 0.0
    %826 = vmatprep.subr.mxu0 0.0
    %827 = vmatpush1.msra.mxu0 0.0
    %828 = vmatprep.subr.mxu0 0.0
    %829 = vmatpush1.msra.mxu0 0.0
    %830 = vmatprep.subr.mxu0 0.0
    %831 = vmatpush1.msra.mxu0 0.0
    %832 = vmatprep.subr.mxu0 0.0
    %833 = vmatpush1.msra.mxu0 0.0
    %834 = vmatprep.subr.mxu0 0.0
    %835 = vmatpush1.msra.mxu0 0.0
    %836 = vmatprep.subr.mxu0 0.0
    %837 = vmatpush1.msra.mxu0 0.0
    %838 = vmatprep.subr.mxu0 0.0
    %839 = vmatpush1.msra.mxu0 0.0
    %840 = vmatprep.subr.mxu0 0.0
    %841 = vmatpush1.msra.mxu0 0.0
    %842 = vmatprep.mubr.f32.mxu0 0.0
    %843 = vmatmul.mubr.f32.gmra.mrb[0].mxu0 %v776
    %v844 = vpop.f32.mrb[0].mxu0
    %v845 = vadd.f32 %v773, %v844
    %v846 = vpop.f32.mrb[0].mxu0
    %847 = vdwg.mxu0
    %848 = vst [vmem:[#allocation13] sm:$0x3] %v845
    // Predicated region
    $region78: #{tpu_custom_call.1} parent=1 // pred_check
      _
    $region79: #{tpu_custom_call.1} parent=1 // pred_check_branch
      %850 = sbr.rel (0) target = $region81
    $region80: #{tpu_custom_call.1} parent=1 // pred_region
      %s852 = ssub.s32 32, 32
      %853 = vsyncadd [#allocation4], %s852
      %s855 = sshll.u32 [#allocation13], 4
      %s856 = int_to_ptr.vmem [resolvable:$true] %s855
      %858 = dma.vmem_to_hbm [thread:$0]  %s856, 32, %s13, [#allocation4]
    $region81: #{tpu_custom_call.1} parent=1 // pred_fallthru
      _
    // Predicated region
    $region82: #{tpu_custom_call.1} parent=1 // pred_check
      _
    $region83: #{tpu_custom_call.1} parent=1 // pred_check_branch
      %860 = sbr.rel (0) target = $region85
    $region84: #{tpu_custom_call.1} parent=1 // pred_region
      %861 = dma.done [#allocation4], 32
    $region85: #{tpu_custom_call.1} parent=1 // pred_fallthru
      _
    %862 = vsyncpa [#allocation3], 1
    %863 = vsyncpa [#allocation6], 1
    %864 = vsyncpa [#allocation9], 1
    %865 = vsyncpa [#allocation12], 1
    %866 = vsyncpa [#allocation4], 1

</llo_original>
